<compile_context>
chip_gen: v6e
topology: v6e:2x2x1
jax: 0.10.0
libtpu: 0.0.40
codegen_flags: <defaults>
</compile_context>

<pallas_src>
import functools
import numpy as np
import jax
import jax.numpy as jnp
from jax.experimental import pallas as pl
from jax.experimental.pallas import tpu as pltpu


# --------------------------------------------------------------------------
# Parameter construction (deterministic, mirrors ImplicitNet.__init__ shapes)
# --------------------------------------------------------------------------
def build_params(key, d_in, d_out, hidden_dims, skip_in, bias=1.0):
    """PyTorch-layout params: weight [out, in], bias [out]."""
    dims = [d_in] + list(hidden_dims) + [d_out]
    num_layers = len(dims)
    params = []
    for l in range(num_layers - 1):
        out_dim = dims[l + 1] - dims[0] if (l + 1) in skip_in else dims[l + 1]
        in_dim = dims[l]
        key, wk = jax.random.split(key)
        if l == num_layers - 2:
            # last layer: N(mean=sqrt(pi)/sqrt(in_dim), std=1e-5), bias = -bias
            w = (np.sqrt(np.pi) / np.sqrt(in_dim)
                 + 1e-5 * jax.random.normal(wk, (out_dim, in_dim), jnp.float32))
            # torch module does `bias = int(bias)` before use, so int() matches the spec
            b = jnp.full((out_dim,), -float(int(bias)), jnp.float32)
        else:
            # hidden layers (multires == 0 path): N(0, sqrt(2)/sqrt(out_dim)), bias = 0
            w = (np.sqrt(2.0) / np.sqrt(out_dim)
                 * jax.random.normal(wk, (out_dim, in_dim), jnp.float32))
            b = jnp.zeros((out_dim,), jnp.float32)
        params.append((w, b))
    return params, dims


def flatten_params_for_kernel(params, dims, skip_in):
    """Split skip-layer weights so the kernel never concatenates activations.
    Returns a flat param list plus a static per-layer layout descriptor."""
    d0 = dims[0]
    flat, layout = [], []
    for l, (w, b) in enumerate(params):
        b2 = b.reshape(-1, 1)                        # [out, 1] -> broadcast along lanes
        if l in skip_in:
            hid = dims[l] - d0                       # width of the hidden part of the concat
            flat += [w[:, :hid], w[:, hid:], b2]     # W_hidden [out, hid], W_input [out, d0]
            layout.append("skip")
        else:
            flat += [w, b2]
            layout.append("plain")
    return flat, tuple(layout)


# --------------------------------------------------------------------------
# Pallas kernel: full MLP on one [features, tile_n] column tile
# --------------------------------------------------------------------------
def _softplus100(x):
    # torch.nn.Softplus(beta=100): log(1 + exp(100*x)) / 100, linear above threshold 20
    z = 100.0 * x
    safe = jnp.minimum(z, 20.0)
    return jnp.where(z > 20.0, x, jnp.log1p(jnp.exp(safe)) * (1.0 / 100.0))


def implicit_net_kernel(layout, *refs):
    # refs = (xT_ref, <flat param refs>, out_ref); activations live as [feat, tile_n]
    xT_ref = refs[0]
    out_ref = refs[-1]
    prefs = refs[1:-1]

    inp = xT_ref[...]                 # [d_in, tile_n] f32
    x = inp
    idx = 0
    num_layers = len(layout)
    inv_sqrt2 = np.float32(1.0 / np.sqrt(2.0))

    for l, kind in enumerate(layout):
        if kind == "skip":
            w_h = prefs[idx][...]     # [out, hidden]
            w_in = prefs[idx + 1][...]  # [out, d_in]
            b = prefs[idx + 2][...]   # [out, 1]
            idx += 3
            # torch: x = cat([x, input], -1) / sqrt(2); x = W @ x + b
            h = (jnp.dot(w_h, x, preferred_element_type=jnp.float32)
                 + jnp.dot(w_in, inp, preferred_element_type=jnp.float32)) * inv_sqrt2 + b
        else:
            w = prefs[idx][...]       # [out, in]
            b = prefs[idx + 1][...]   # [out, 1]
            idx += 2
            h = jnp.dot(w, x, preferred_element_type=jnp.float32) + b
        if l < num_layers - 1:
            h = _softplus100(h)
        x = h

    out_ref[...] = x.astype(out_ref.dtype)   # [d_out, tile_n] -> lane-dense store


# --------------------------------------------------------------------------
# Wrapper: batch-on-lanes tiling, lane-dense output, cost estimate
# --------------------------------------------------------------------------
def implicit_net_forward(x, params, dims, skip_in, tile_n=512):
    assert tile_n % 128 == 0, "tile_n must be a multiple of 128 (lane width)"
    N, d_in = x.shape
    d_out = dims[-1]

    flat_params, layout = flatten_params_for_kernel(params, dims, skip_in)

    # transpose once in the wrapper so the batch axis sits on TPU lanes
    xT = x.T                                   # [d_in, N]
    n_pad = (-N) % tile_n
    if n_pad:
        xT = jnp.pad(xT, ((0, 0), (0, n_pad)))
    Np = xT.shape[1]
    grid = (Np // tile_n,)

    in_specs = [pl.BlockSpec((d_in, tile_n), lambda i: (0, i))]
    for p in flat_params:
        in_specs.append(pl.BlockSpec(p.shape, lambda i: (0, 0)))
    out_spec = pl.BlockSpec((d_out, tile_n), lambda i: (0, i))

    # advisory cost estimate for XLA's scheduler
    flops = 0
    transc = 0
    for l, (w, _) in enumerate(params):
        out_dim, in_dim = w.shape
        flops += 2 * Np * in_dim * out_dim
        if l < len(params) - 1:
            transc += 2 * Np * out_dim               # exp + log1p per hidden activation
    bytes_accessed = 4 * (Np * (d_in + d_out) + sum(int(p.size) for p in flat_params))
    cost = pl.CostEstimate(flops=int(flops), transcendentals=int(transc),
                           bytes_accessed=int(bytes_accessed))

    kernel = functools.partial(implicit_net_kernel, layout)

    out = pl.pallas_call(
        kernel,
        out_shape=jax.ShapeDtypeStruct((d_out, Np), jnp.float32),
        grid_spec=pltpu.PrefetchScalarGridSpec(
            num_scalar_prefetch=0,
            grid=grid,
            in_specs=in_specs,
            out_specs=out_spec,
        ),
        compiler_params=pltpu.CompilerParams(
            dimension_semantics=("parallel",)),
        cost_estimate=cost,
    )(xT, *flat_params)

    return out[:, :N].T                        # back to [N, d_out]


# --------------------------------------------------------------------------
# Pure-JAX reference (torch-layout math) for correctness check
# --------------------------------------------------------------------------
def implicit_net_ref(x, params, dims, skip_in):
    num_layers = len(dims)
    inp = x
    h = inp
    for l in range(num_layers - 1):
        w, b = params[l]
        if l in skip_in:
            h = jnp.concatenate([h, inp], axis=-1) / np.sqrt(2.0)
        h = h @ w.T + b
        if l < num_layers - 2:
            h = _softplus100(h)
    return h


if __name__ == "__main__":
    # config consistent with ImplicitNet(d_in=6, d_out=1, dims=[32]*4, skip_in=(2,))
    d_in, d_out = 6, 1
    hidden = [32, 32, 32, 32]
    skip_in = (2,)
    N = 2048            # tile_n=512 -> grid of 4 steps (>=2 so both v7x TCs stay busy)

    key = jax.random.PRNGKey(0)
    pkey, xkey = jax.random.split(key)
    params, dims = build_params(pkey, d_in, d_out, hidden, skip_in, bias=1.0)

    x = jax.random.normal(xkey, (N, d_in), jnp.float32)

    out = implicit_net_forward(x, params, dims, skip_in, tile_n=512)
    out = jax.block_until_ready(out)

    ref = implicit_net_ref(x, params, dims, skip_in)
    np.testing.assert_allclose(np.asarray(out), np.asarray(ref), rtol=1e-4, atol=1e-4)

    print("KERNEL_OK")
</pallas_src>

<mosaic_0001>
module attributes {stable_mosaic.version = 11 : i64} {
  func.func @implicit_net_kernel(%arg0: i32, %arg1: memref<6x512xf32, #tpu.memory_space<vmem>>, %arg2: memref<32x6xf32, #tpu.memory_space<vmem>>, %arg3: memref<32x1xf32, #tpu.memory_space<vmem>>, %arg4: memref<26x32xf32, #tpu.memory_space<vmem>>, %arg5: memref<26x1xf32, #tpu.memory_space<vmem>>, %arg6: memref<32x26xf32, #tpu.memory_space<vmem>>, %arg7: memref<32x6xf32, #tpu.memory_space<vmem>>, %arg8: memref<32x1xf32, #tpu.memory_space<vmem>>, %arg9: memref<32x32xf32, #tpu.memory_space<vmem>>, %arg10: memref<32x1xf32, #tpu.memory_space<vmem>>, %arg11: memref<1x32xf32, #tpu.memory_space<vmem>>, %arg12: memref<1x1xf32, #tpu.memory_space<vmem>>, %arg13: memref<1x512xf32, #tpu.memory_space<vmem>>) attributes {dimension_semantics = [#tpu.dimension_semantics<parallel>], iteration_bounds = array<i64: 4>, scalar_prefetch = 0 : i64, scratch_operands = 0 : i64, tpu.core_type = #tpu.core_type<tc>, window_params = [{transform_indices = @transform_0, window_bounds = array<i64: 6, 512>}, {pipeline_mode = #tpu.pipeline_mode<synchronous>, transform_indices = @transform_1, window_bounds = array<i64: 32, 6>}, {pipeline_mode = #tpu.pipeline_mode<synchronous>, transform_indices = @transform_2, window_bounds = array<i64: 32, 1>}, {pipeline_mode = #tpu.pipeline_mode<synchronous>, transform_indices = @transform_3, window_bounds = array<i64: 26, 32>}, {pipeline_mode = #tpu.pipeline_mode<synchronous>, transform_indices = @transform_4, window_bounds = array<i64: 26, 1>}, {pipeline_mode = #tpu.pipeline_mode<synchronous>, transform_indices = @transform_5, window_bounds = array<i64: 32, 26>}, {pipeline_mode = #tpu.pipeline_mode<synchronous>, transform_indices = @transform_6, window_bounds = array<i64: 32, 6>}, {pipeline_mode = #tpu.pipeline_mode<synchronous>, transform_indices = @transform_7, window_bounds = array<i64: 32, 1>}, {pipeline_mode = #tpu.pipeline_mode<synchronous>, transform_indices = @transform_8, window_bounds = array<i64: 32, 32>}, {pipeline_mode = #tpu.pipeline_mode<synchronous>, transform_indices = @transform_9, window_bounds = array<i64: 32, 1>}, {pipeline_mode = #tpu.pipeline_mode<synchronous>, transform_indices = @transform_10, window_bounds = array<i64: 1, 32>}, {pipeline_mode = #tpu.pipeline_mode<synchronous>, transform_indices = @transform_11, window_bounds = array<i64: 1, 1>}, {transform_indices = @transform_12, window_bounds = array<i64: 1, 512>}]} {
    %c0 = arith.constant 0 : index
    %c0_0 = arith.constant 0 : index
    %0 = vector.load %arg1[%c0, %c0_0] : memref<6x512xf32, #tpu.memory_space<vmem>>, vector<6x512xf32>
    %c0_1 = arith.constant 0 : index
    %c0_2 = arith.constant 0 : index
    %1 = vector.load %arg2[%c0_1, %c0_2] : memref<32x6xf32, #tpu.memory_space<vmem>>, vector<32x6xf32>
    %c0_3 = arith.constant 0 : index
    %c0_4 = arith.constant 0 : index
    %2 = vector.load %arg3[%c0_3, %c0_4] : memref<32x1xf32, #tpu.memory_space<vmem>>, vector<32x1xf32>
    %cst = arith.constant dense<0.000000e+00> : vector<32x512xf32>
    %3 = tpu.matmul %1, %0, %cst {dimension_numbers = #tpu.dot_dimension_numbers<[1], [0], [0], [1], [0, 0, 1, 1], [], []>} : vector<32x6xf32>, vector<6x512xf32>, vector<32x512xf32> -> vector<32x512xf32>
    %4 = vector.broadcast %2 : vector<32x1xf32> to vector<32x512xf32>
    %5 = arith.addf %3, %4 : vector<32x512xf32>
    %cst_5 = arith.constant 1.000000e+02 : f32
    %6 = vector.broadcast %cst_5 : f32 to vector<32x512xf32>
    %7 = arith.mulf %6, %5 : vector<32x512xf32>
    %cst_6 = arith.constant 2.000000e+01 : f32
    %8 = vector.broadcast %cst_6 : f32 to vector<32x512xf32>
    %9 = arith.minimumf %7, %8 : vector<32x512xf32>
    %cst_7 = arith.constant 2.000000e+01 : f32
    %10 = vector.broadcast %cst_7 : f32 to vector<32x512xf32>
    %11 = arith.cmpf ogt, %7, %10 : vector<32x512xf32>
    %12 = math.exp %9 : vector<32x512xf32>
    %13 = math.log1p %12 : vector<32x512xf32>
    %cst_8 = arith.constant 0.00999999977 : f32
    %14 = vector.broadcast %cst_8 : f32 to vector<32x512xf32>
    %15 = arith.mulf %13, %14 : vector<32x512xf32>
    %16 = arith.select %11, %5, %15 : vector<32x512xi1>, vector<32x512xf32>
    %c0_9 = arith.constant 0 : index
    %c0_10 = arith.constant 0 : index
    %17 = vector.load %arg4[%c0_9, %c0_10] : memref<26x32xf32, #tpu.memory_space<vmem>>, vector<26x32xf32>
    %c0_11 = arith.constant 0 : index
    %c0_12 = arith.constant 0 : index
    %18 = vector.load %arg5[%c0_11, %c0_12] : memref<26x1xf32, #tpu.memory_space<vmem>>, vector<26x1xf32>
    %cst_13 = arith.constant dense<0.000000e+00> : vector<26x512xf32>
    %19 = tpu.matmul %17, %16, %cst_13 {dimension_numbers = #tpu.dot_dimension_numbers<[1], [0], [0], [1], [0, 0, 1, 1], [], []>} : vector<26x32xf32>, vector<32x512xf32>, vector<26x512xf32> -> vector<26x512xf32>
    %20 = vector.broadcast %18 : vector<26x1xf32> to vector<26x512xf32>
    %21 = arith.addf %19, %20 : vector<26x512xf32>
    %cst_14 = arith.constant 1.000000e+02 : f32
    %22 = vector.broadcast %cst_14 : f32 to vector<26x512xf32>
    %23 = arith.mulf %22, %21 : vector<26x512xf32>
    %cst_15 = arith.constant 2.000000e+01 : f32
    %24 = vector.broadcast %cst_15 : f32 to vector<26x512xf32>
    %25 = arith.minimumf %23, %24 : vector<26x512xf32>
    %cst_16 = arith.constant 2.000000e+01 : f32
    %26 = vector.broadcast %cst_16 : f32 to vector<26x512xf32>
    %27 = arith.cmpf ogt, %23, %26 : vector<26x512xf32>
    %28 = math.exp %25 : vector<26x512xf32>
    %29 = math.log1p %28 : vector<26x512xf32>
    %cst_17 = arith.constant 0.00999999977 : f32
    %30 = vector.broadcast %cst_17 : f32 to vector<26x512xf32>
    %31 = arith.mulf %29, %30 : vector<26x512xf32>
    %32 = arith.select %27, %21, %31 : vector<26x512xi1>, vector<26x512xf32>
    %c0_18 = arith.constant 0 : index
    %c0_19 = arith.constant 0 : index
    %33 = vector.load %arg6[%c0_18, %c0_19] : memref<32x26xf32, #tpu.memory_space<vmem>>, vector<32x26xf32>
    %c0_20 = arith.constant 0 : index
    %c0_21 = arith.constant 0 : index
    %34 = vector.load %arg7[%c0_20, %c0_21] : memref<32x6xf32, #tpu.memory_space<vmem>>, vector<32x6xf32>
    %c0_22 = arith.constant 0 : index
    %c0_23 = arith.constant 0 : index
    %35 = vector.load %arg8[%c0_22, %c0_23] : memref<32x1xf32, #tpu.memory_space<vmem>>, vector<32x1xf32>
    %cst_24 = arith.constant dense<0.000000e+00> : vector<32x512xf32>
    %36 = tpu.matmul %33, %32, %cst_24 {dimension_numbers = #tpu.dot_dimension_numbers<[1], [0], [0], [1], [0, 0, 1, 1], [], []>} : vector<32x26xf32>, vector<26x512xf32>, vector<32x512xf32> -> vector<32x512xf32>
    %cst_25 = arith.constant dense<0.000000e+00> : vector<32x512xf32>
    %37 = tpu.matmul %34, %0, %cst_25 {dimension_numbers = #tpu.dot_dimension_numbers<[1], [0], [0], [1], [0, 0, 1, 1], [], []>} : vector<32x6xf32>, vector<6x512xf32>, vector<32x512xf32> -> vector<32x512xf32>
    %38 = arith.addf %36, %37 : vector<32x512xf32>
    %cst_26 = arith.constant 0.707106769 : f32
    %39 = vector.broadcast %cst_26 : f32 to vector<32x512xf32>
    %40 = arith.mulf %38, %39 : vector<32x512xf32>
    %41 = vector.broadcast %35 : vector<32x1xf32> to vector<32x512xf32>
    %42 = arith.addf %40, %41 : vector<32x512xf32>
    %cst_27 = arith.constant 1.000000e+02 : f32
    %43 = vector.broadcast %cst_27 : f32 to vector<32x512xf32>
    %44 = arith.mulf %43, %42 : vector<32x512xf32>
    %cst_28 = arith.constant 2.000000e+01 : f32
    %45 = vector.broadcast %cst_28 : f32 to vector<32x512xf32>
    %46 = arith.minimumf %44, %45 : vector<32x512xf32>
    %cst_29 = arith.constant 2.000000e+01 : f32
    %47 = vector.broadcast %cst_29 : f32 to vector<32x512xf32>
    %48 = arith.cmpf ogt, %44, %47 : vector<32x512xf32>
    %49 = math.exp %46 : vector<32x512xf32>
    %50 = math.log1p %49 : vector<32x512xf32>
    %cst_30 = arith.constant 0.00999999977 : f32
    %51 = vector.broadcast %cst_30 : f32 to vector<32x512xf32>
    %52 = arith.mulf %50, %51 : vector<32x512xf32>
    %53 = arith.select %48, %42, %52 : vector<32x512xi1>, vector<32x512xf32>
    %c0_31 = arith.constant 0 : index
    %c0_32 = arith.constant 0 : index
    %54 = vector.load %arg9[%c0_31, %c0_32] : memref<32x32xf32, #tpu.memory_space<vmem>>, vector<32x32xf32>
    %c0_33 = arith.constant 0 : index
    %c0_34 = arith.constant 0 : index
    %55 = vector.load %arg10[%c0_33, %c0_34] : memref<32x1xf32, #tpu.memory_space<vmem>>, vector<32x1xf32>
    %cst_35 = arith.constant dense<0.000000e+00> : vector<32x512xf32>
    %56 = tpu.matmul %54, %53, %cst_35 {dimension_numbers = #tpu.dot_dimension_numbers<[1], [0], [0], [1], [0, 0, 1, 1], [], []>} : vector<32x32xf32>, vector<32x512xf32>, vector<32x512xf32> -> vector<32x512xf32>
    %57 = vector.broadcast %55 : vector<32x1xf32> to vector<32x512xf32>
    %58 = arith.addf %56, %57 : vector<32x512xf32>
    %cst_36 = arith.constant 1.000000e+02 : f32
    %59 = vector.broadcast %cst_36 : f32 to vector<32x512xf32>
    %60 = arith.mulf %59, %58 : vector<32x512xf32>
    %cst_37 = arith.constant 2.000000e+01 : f32
    %61 = vector.broadcast %cst_37 : f32 to vector<32x512xf32>
    %62 = arith.minimumf %60, %61 : vector<32x512xf32>
    %cst_38 = arith.constant 2.000000e+01 : f32
    %63 = vector.broadcast %cst_38 : f32 to vector<32x512xf32>
    %64 = arith.cmpf ogt, %60, %63 : vector<32x512xf32>
    %65 = math.exp %62 : vector<32x512xf32>
    %66 = math.log1p %65 : vector<32x512xf32>
    %cst_39 = arith.constant 0.00999999977 : f32
    %67 = vector.broadcast %cst_39 : f32 to vector<32x512xf32>
    %68 = arith.mulf %66, %67 : vector<32x512xf32>
    %69 = arith.select %64, %58, %68 : vector<32x512xi1>, vector<32x512xf32>
    %c0_40 = arith.constant 0 : index
    %c0_41 = arith.constant 0 : index
    %70 = vector.load %arg11[%c0_40, %c0_41] : memref<1x32xf32, #tpu.memory_space<vmem>>, vector<1x32xf32>
    %c0_42 = arith.constant 0 : index
    %c0_43 = arith.constant 0 : index
    %71 = vector.load %arg12[%c0_42, %c0_43] : memref<1x1xf32, #tpu.memory_space<vmem>>, vector<1x1xf32>
    %cst_44 = arith.constant dense<0.000000e+00> : vector<1x512xf32>
    %72 = tpu.matmul %70, %69, %cst_44 {dimension_numbers = #tpu.dot_dimension_numbers<[1], [0], [0], [1], [0, 0, 1, 1], [], []>} : vector<1x32xf32>, vector<32x512xf32>, vector<1x512xf32> -> vector<1x512xf32>
    %73 = vector.broadcast %71 : vector<1x1xf32> to vector<1x512xf32>
    %74 = arith.addf %72, %73 : vector<1x512xf32>
    %c0_45 = arith.constant 0 : index
    %c0_46 = arith.constant 0 : index
    %75 = vector.load %arg13[%c0_45, %c0_46] : memref<1x512xf32, #tpu.memory_space<vmem>>, vector<1x512xf32>
    tpu.vector_store %arg13[%c0_45, %c0_46], %74 {strides = array<i32>} : memref<1x512xf32, #tpu.memory_space<vmem>>, vector<1x512xf32>,
    return
  }
  func.func @transform_0(%arg0: i32) -> (i32, i32) {
    %c0_i32 = arith.constant 0 : i32
    %c0_i32_0 = arith.constant 0 : i32
    return %c0_i32, %arg0 : i32, i32
  }
  func.func @transform_1(%arg0: i32) -> (i32, i32) {
    %c0_i32 = arith.constant 0 : i32
    %c0_i32_0 = arith.constant 0 : i32
    %c0_i32_1 = arith.constant 0 : i32
    return %c0_i32, %c0_i32_0 : i32, i32
  }
  func.func @transform_2(%arg0: i32) -> (i32, i32) {
    %c0_i32 = arith.constant 0 : i32
    %c0_i32_0 = arith.constant 0 : i32
    %c0_i32_1 = arith.constant 0 : i32
    return %c0_i32, %c0_i32_0 : i32, i32
  }
  func.func @transform_3(%arg0: i32) -> (i32, i32) {
    %c0_i32 = arith.constant 0 : i32
    %c0_i32_0 = arith.constant 0 : i32
    %c0_i32_1 = arith.constant 0 : i32
    return %c0_i32, %c0_i32_0 : i32, i32
  }
  func.func @transform_4(%arg0: i32) -> (i32, i32) {
    %c0_i32 = arith.constant 0 : i32
    %c0_i32_0 = arith.constant 0 : i32
    %c0_i32_1 = arith.constant 0 : i32
    return %c0_i32, %c0_i32_0 : i32, i32
  }
  func.func @transform_5(%arg0: i32) -> (i32, i32) {
    %c0_i32 = arith.constant 0 : i32
    %c0_i32_0 = arith.constant 0 : i32
    %c0_i32_1 = arith.constant 0 : i32
    return %c0_i32, %c0_i32_0 : i32, i32
  }
  func.func @transform_6(%arg0: i32) -> (i32, i32) {
    %c0_i32 = arith.constant 0 : i32
    %c0_i32_0 = arith.constant 0 : i32
    %c0_i32_1 = arith.constant 0 : i32
    return %c0_i32, %c0_i32_0 : i32, i32
  }
  func.func @transform_7(%arg0: i32) -> (i32, i32) {
    %c0_i32 = arith.constant 0 : i32
    %c0_i32_0 = arith.constant 0 : i32
    %c0_i32_1 = arith.constant 0 : i32
    return %c0_i32, %c0_i32_0 : i32, i32
  }
  func.func @transform_8(%arg0: i32) -> (i32, i32) {
    %c0_i32 = arith.constant 0 : i32
    %c0_i32_0 = arith.constant 0 : i32
    %c0_i32_1 = arith.constant 0 : i32
    return %c0_i32, %c0_i32_0 : i32, i32
  }
  func.func @transform_9(%arg0: i32) -> (i32, i32) {
    %c0_i32 = arith.constant 0 : i32
    %c0_i32_0 = arith.constant 0 : i32
    %c0_i32_1 = arith.constant 0 : i32
    return %c0_i32, %c0_i32_0 : i32, i32
  }
  func.func @transform_10(%arg0: i32) -> (i32, i32) {
    %c0_i32 = arith.constant 0 : i32
    %c0_i32_0 = arith.constant 0 : i32
    %c0_i32_1 = arith.constant 0 : i32
    return %c0_i32, %c0_i32_0 : i32, i32
  }
  func.func @transform_11(%arg0: i32) -> (i32, i32) {
    %c0_i32 = arith.constant 0 : i32
    %c0_i32_0 = arith.constant 0 : i32
    %c0_i32_1 = arith.constant 0 : i32
    return %c0_i32, %c0_i32_0 : i32, i32
  }
  func.func @transform_12(%arg0: i32) -> (i32, i32) {
    %c0_i32 = arith.constant 0 : i32
    %c0_i32_0 = arith.constant 0 : i32
    return %c0_i32, %arg0 : i32, i32
  }
}

</mosaic_0001>

<llo_original>
// kernel: tpu_custom_call.1
$region0: #{tpu_custom_call.1}
  #allocation0 [shape = 'u32[]', space=smem, size = 0x4, offset = 0x4, fixed_abs, tag = 'smem constant byte address 0x4 - core index']
  #allocation1 [shape = 'u32[144,128]{1,0:T(1,128)}', space=vmem, size = 0x12000, scoped, tag = 'internal scratch']
  #allocation2 [shape = 'f32[1,1]{1,0:T(1,128)S(1)}', space=vmem, size = 0x200, scoped, tag = 'scoped memory for tpu_custom_call.1']
  %s0 = inlined_call_operand.hbm [shape: f32[6,2048], index: 0, kind: input, shape index: {}]
  %s1 = inlined_call_operand.vmem [shape: f32[32,6], index: 1, kind: input, shape index: {}]
  %s2 = inlined_call_operand.vmem [shape: f32[32,1], index: 2, kind: input, shape index: {}]
  %s3 = inlined_call_operand.vmem [shape: f32[26,32], index: 3, kind: input, shape index: {}]
  %s4 = inlined_call_operand.vmem [shape: f32[26,1], index: 4, kind: input, shape index: {}]
  %s5 = inlined_call_operand.vmem [shape: f32[32,26], index: 5, kind: input, shape index: {}]
  %s6 = inlined_call_operand.vmem [shape: f32[32,6], index: 6, kind: input, shape index: {}]
  %s7 = inlined_call_operand.vmem [shape: f32[32,1], index: 7, kind: input, shape index: {}]
  %s8 = inlined_call_operand.vmem [shape: f32[32,32], index: 8, kind: input, shape index: {}]
  %s9 = inlined_call_operand.vmem [shape: f32[32,1], index: 9, kind: input, shape index: {}]
  %s10 = inlined_call_operand.vmem [shape: f32[1,32], index: 10, kind: input, shape index: {}]
  %s11 = inlined_call_operand.<no memory space> [shape: f32[1,1], index: 11, kind: input, shape index: {}]
  %s12 = inlined_call_operand.hbm [shape: f32[1,2048], index: 12, kind: output, shape index: {}]
  %s13 = sld [smem:[#allocation0]]
  $region85: #{tpu_custom_call.1} parent=0
    _
  %s15 = ssub.s32 1, %s13
  %s16 = scalar_select 0, %s15, %s13
  %v17 = vstv %s11
  %18 = vst [vmem:[#allocation2] sm:$0x1] %v17
  $region1: #{tpu_custom_call.1} parent=0
    #allocation3 [shape = 'u8[32768]{0}', space=vmem, size = 0x8000, scoped, tag = 'input window, operand 0']
    #allocation4 [shape = 's32[2]{0}', space=sflag, size = 0x8, scoped, tag = 'scoped memory for tpu_custom_call.1']
    #allocation5 [shape = 's32[2]{0}', space=sflag, size = 0x8, scoped, tag = 'scoped memory for tpu_custom_call.1']
    #allocation6 [shape = 'u8[4096]{0}', space=vmem, size = 0x1000, scoped, tag = 'output window, operand 0']
    %19 = vsyncpa [#allocation4], 0
    %s20 = scalar_lea.sflag [#allocation4], 1
    %21 = vsyncpa %s20, 0
    %22 = vsyncpa [#allocation5], 0
    %s23 = scalar_lea.sflag [#allocation5], 1
    %24 = vsyncpa %s23, 0
    loop: start=0, step=1, limit=6
    $region2: #{tpu_custom_call.1} parent=1 // loop_pre_header
      _
    $region3: #{tpu_custom_call.1} parent=1 // loop_header
      %s26 = sphi 0, %s30
      %p27 = scmp.ge.s32.totalorder %s26, 6
      %s36 = sphi 0, %s38
      %s39 = sphi 0, %s36
      %s40 = sphi 0, %s39
      %s56 = sphi 0, %s40
      %s60 = sphi 0, %s60
      %s62 = sphi 0, %s60
      %s63 = sphi 0, %s62
      %s77 = sphi 0, %s63
      %s81 = sphi 0, %s81
      %s83 = sphi 0, %s81
      %s84 = sphi 0, %s83
      %s98 = sphi 0, %s84
      %s102 = sphi 0, %s102
      %s104 = sphi 0, %s102
      %s105 = sphi 0, %s104
      %s119 = sphi 0, %s105
      %s123 = sphi 0, %s123
      %s125 = sphi 0, %s123
      %s126 = sphi 0, %s125
      %s140 = sphi 0, %s126
      %s144 = sphi 0, %s144
      %s146 = sphi 0, %s144
      %s147 = sphi 0, %s146
      %s161 = sphi 0, %s147
      %s165 = sphi 0, %s165
      %s167 = sphi 0, %s165
      %s168 = sphi 0, %s167
      %s182 = sphi 0, %s168
      %s186 = sphi 0, %s186
      %s188 = sphi 0, %s186
      %s189 = sphi 0, %s188
      %s203 = sphi 0, %s189
      %s207 = sphi 0, %s207
      %s209 = sphi 0, %s207
      %s210 = sphi 0, %s209
      %s224 = sphi 0, %s210
      %s228 = sphi 0, %s228
      %s230 = sphi 0, %s228
      %s231 = sphi 0, %s230
      %s245 = sphi 0, %s231
      %s249 = sphi 0, %s249
      %s251 = sphi 0, %s249
      %s252 = sphi 0, %s251
      %s266 = sphi 0, %s252
      %s270 = sphi 0, %s270
      %s272 = sphi 0, %s270
      %s273 = sphi 0, %s272
      %s287 = sphi 0, %s273
      %s293 = sphi 0, %s295
      %s296 = sphi 0, %s293
      %s297 = sphi 0, %s296
      %s313 = sphi 0, %s297
    $region4: #{tpu_custom_call.1} parent=1 // loop_header_branch
      %29 = sbr.rel (%p27) target = $region8
    $region5: #{tpu_custom_call.1} parent=1 // loop_body
      %s31 = ssub.s32 %s26, 1
      %s32 = ssub.s32 %s26, 2
      %s33 = sadd.s32 %s26, 1
      %s34 = ssub.s32 %s26, %s33
      %p35 = scmp.eq.s32.totalorder %s34, 0
      %s37 = sadd.s32 %s36, 1
      %s38 = scalar_select %p35, %s36, %s37
      %p41 = pneg %p35
      %p42 = scmp.eq.s32.totalorder %s26, 3
      %p43 = por %p41, %p42
      %p44 = scmp.ne.s32.totalorder %s36, %s39
      %p45 = scmp.eq.s32.totalorder %s26, 0
      %p46 = por %p44, %p45
      %p47 = scmp.ne.s32.totalorder %s36, %s39
      %p48 = scmp.eq.s32.totalorder %s31, 3
      %p49 = por %p47, %p48
      %p50 = scmp.ne.s32.totalorder %s39, %s40
      %p51 = scmp.eq.s32.totalorder %s31, 0
      %p52 = por %p50, %p51
      %p53 = scmp.ne.s32.totalorder %s39, %s40
      %p54 = scmp.eq.s32.totalorder %s32, 3
      %p55 = por %p53, %p54
      %p57 = scmp.ne.s32.totalorder %s40, %s56
      %p58 = scmp.eq.s32.totalorder %s32, 0
      %p59 = por %p57, %p58
      %s61 = sadd.s32 %s60, 1
      %p64 = scmp.eq.s32.totalorder %s26, 3
      %p65 = scmp.ne.s32.totalorder %s60, %s62
      %p66 = scmp.eq.s32.totalorder %s26, 0
      %p67 = por %p65, %p66
      %p68 = scmp.ne.s32.totalorder %s60, %s62
      %p69 = scmp.eq.s32.totalorder %s31, 3
      %p70 = por %p68, %p69
      %p71 = scmp.ne.s32.totalorder %s62, %s63
      %p72 = scmp.eq.s32.totalorder %s31, 0
      %p73 = por %p71, %p72
      %p74 = scmp.ne.s32.totalorder %s62, %s63
      %p75 = scmp.eq.s32.totalorder %s32, 3
      %p76 = por %p74, %p75
      %p78 = scmp.ne.s32.totalorder %s63, %s77
      %p79 = scmp.eq.s32.totalorder %s32, 0
      %p80 = por %p78, %p79
      %s82 = sadd.s32 %s81, 1
      %p85 = scmp.eq.s32.totalorder %s26, 3
      %p86 = scmp.ne.s32.totalorder %s81, %s83
      %p87 = scmp.eq.s32.totalorder %s26, 0
      %p88 = por %p86, %p87
      %p89 = scmp.ne.s32.totalorder %s81, %s83
      %p90 = scmp.eq.s32.totalorder %s31, 3
      %p91 = por %p89, %p90
      %p92 = scmp.ne.s32.totalorder %s83, %s84
      %p93 = scmp.eq.s32.totalorder %s31, 0
      %p94 = por %p92, %p93
      %p95 = scmp.ne.s32.totalorder %s83, %s84
      %p96 = scmp.eq.s32.totalorder %s32, 3
      %p97 = por %p95, %p96
      %p99 = scmp.ne.s32.totalorder %s84, %s98
      %p100 = scmp.eq.s32.totalorder %s32, 0
      %p101 = por %p99, %p100
      %s103 = sadd.s32 %s102, 1
      %p106 = scmp.eq.s32.totalorder %s26, 3
      %p107 = scmp.ne.s32.totalorder %s102, %s104
      %p108 = scmp.eq.s32.totalorder %s26, 0
      %p109 = por %p107, %p108
      %p110 = scmp.ne.s32.totalorder %s102, %s104
      %p111 = scmp.eq.s32.totalorder %s31, 3
      %p112 = por %p110, %p111
      %p113 = scmp.ne.s32.totalorder %s104, %s105
      %p114 = scmp.eq.s32.totalorder %s31, 0
      %p115 = por %p113, %p114
      %p116 = scmp.ne.s32.totalorder %s104, %s105
      %p117 = scmp.eq.s32.totalorder %s32, 3
      %p118 = por %p116, %p117
      %p120 = scmp.ne.s32.totalorder %s105, %s119
      %p121 = scmp.eq.s32.totalorder %s32, 0
      %p122 = por %p120, %p121
      %s124 = sadd.s32 %s123, 1
      %p127 = scmp.eq.s32.totalorder %s26, 3
      %p128 = scmp.ne.s32.totalorder %s123, %s125
      %p129 = scmp.eq.s32.totalorder %s26, 0
      %p130 = por %p128, %p129
      %p131 = scmp.ne.s32.totalorder %s123, %s125
      %p132 = scmp.eq.s32.totalorder %s31, 3
      %p133 = por %p131, %p132
      %p134 = scmp.ne.s32.totalorder %s125, %s126
      %p135 = scmp.eq.s32.totalorder %s31, 0
      %p136 = por %p134, %p135
      %p137 = scmp.ne.s32.totalorder %s125, %s126
      %p138 = scmp.eq.s32.totalorder %s32, 3
      %p139 = por %p137, %p138
      %p141 = scmp.ne.s32.totalorder %s126, %s140
      %p142 = scmp.eq.s32.totalorder %s32, 0
      %p143 = por %p141, %p142
      %s145 = sadd.s32 %s144, 1
      %p148 = scmp.eq.s32.totalorder %s26, 3
      %p149 = scmp.ne.s32.totalorder %s144, %s146
      %p150 = scmp.eq.s32.totalorder %s26, 0
      %p151 = por %p149, %p150
      %p152 = scmp.ne.s32.totalorder %s144, %s146
      %p153 = scmp.eq.s32.totalorder %s31, 3
      %p154 = por %p152, %p153
      %p155 = scmp.ne.s32.totalorder %s146, %s147
      %p156 = scmp.eq.s32.totalorder %s31, 0
      %p157 = por %p155, %p156
      %p158 = scmp.ne.s32.totalorder %s146, %s147
      %p159 = scmp.eq.s32.totalorder %s32, 3
      %p160 = por %p158, %p159
      %p162 = scmp.ne.s32.totalorder %s147, %s161
      %p163 = scmp.eq.s32.totalorder %s32, 0
      %p164 = por %p162, %p163
      %s166 = sadd.s32 %s165, 1
      %p169 = scmp.eq.s32.totalorder %s26, 3
      %p170 = scmp.ne.s32.totalorder %s165, %s167
      %p171 = scmp.eq.s32.totalorder %s26, 0
      %p172 = por %p170, %p171
      %p173 = scmp.ne.s32.totalorder %s165, %s167
      %p174 = scmp.eq.s32.totalorder %s31, 3
      %p175 = por %p173, %p174
      %p176 = scmp.ne.s32.totalorder %s167, %s168
      %p177 = scmp.eq.s32.totalorder %s31, 0
      %p178 = por %p176, %p177
      %p179 = scmp.ne.s32.totalorder %s167, %s168
      %p180 = scmp.eq.s32.totalorder %s32, 3
      %p181 = por %p179, %p180
      %p183 = scmp.ne.s32.totalorder %s168, %s182
      %p184 = scmp.eq.s32.totalorder %s32, 0
      %p185 = por %p183, %p184
      %s187 = sadd.s32 %s186, 1
      %p190 = scmp.eq.s32.totalorder %s26, 3
      %p191 = scmp.ne.s32.totalorder %s186, %s188
      %p192 = scmp.eq.s32.totalorder %s26, 0
      %p193 = por %p191, %p192
      %p194 = scmp.ne.s32.totalorder %s186, %s188
      %p195 = scmp.eq.s32.totalorder %s31, 3
      %p196 = por %p194, %p195
      %p197 = scmp.ne.s32.totalorder %s188, %s189
      %p198 = scmp.eq.s32.totalorder %s31, 0
      %p199 = por %p197, %p198
      %p200 = scmp.ne.s32.totalorder %s188, %s189
      %p201 = scmp.eq.s32.totalorder %s32, 3
      %p202 = por %p200, %p201
      %p204 = scmp.ne.s32.totalorder %s189, %s203
      %p205 = scmp.eq.s32.totalorder %s32, 0
      %p206 = por %p204, %p205
      %s208 = sadd.s32 %s207, 1
      %p211 = scmp.eq.s32.totalorder %s26, 3
      %p212 = scmp.ne.s32.totalorder %s207, %s209
      %p213 = scmp.eq.s32.totalorder %s26, 0
      %p214 = por %p212, %p213
      %p215 = scmp.ne.s32.totalorder %s207, %s209
      %p216 = scmp.eq.s32.totalorder %s31, 3
      %p217 = por %p215, %p216
      %p218 = scmp.ne.s32.totalorder %s209, %s210
      %p219 = scmp.eq.s32.totalorder %s31, 0
      %p220 = por %p218, %p219
      %p221 = scmp.ne.s32.totalorder %s209, %s210
      %p222 = scmp.eq.s32.totalorder %s32, 3
      %p223 = por %p221, %p222
      %p225 = scmp.ne.s32.totalorder %s210, %s224
      %p226 = scmp.eq.s32.totalorder %s32, 0
      %p227 = por %p225, %p226
      %s229 = sadd.s32 %s228, 1
      %p232 = scmp.eq.s32.totalorder %s26, 3
      %p233 = scmp.ne.s32.totalorder %s228, %s230
      %p234 = scmp.eq.s32.totalorder %s26, 0
      %p235 = por %p233, %p234
      %p236 = scmp.ne.s32.totalorder %s228, %s230
      %p237 = scmp.eq.s32.totalorder %s31, 3
      %p238 = por %p236, %p237
      %p239 = scmp.ne.s32.totalorder %s230, %s231
      %p240 = scmp.eq.s32.totalorder %s31, 0
      %p241 = por %p239, %p240
      %p242 = scmp.ne.s32.totalorder %s230, %s231
      %p243 = scmp.eq.s32.totalorder %s32, 3
      %p244 = por %p242, %p243
      %p246 = scmp.ne.s32.totalorder %s231, %s245
      %p247 = scmp.eq.s32.totalorder %s32, 0
      %p248 = por %p246, %p247
      %s250 = sadd.s32 %s249, 1
      %p253 = scmp.eq.s32.totalorder %s26, 3
      %p254 = scmp.ne.s32.totalorder %s249, %s251
      %p255 = scmp.eq.s32.totalorder %s26, 0
      %p256 = por %p254, %p255
      %p257 = scmp.ne.s32.totalorder %s249, %s251
      %p258 = scmp.eq.s32.totalorder %s31, 3
      %p259 = por %p257, %p258
      %p260 = scmp.ne.s32.totalorder %s251, %s252
      %p261 = scmp.eq.s32.totalorder %s31, 0
      %p262 = por %p260, %p261
      %p263 = scmp.ne.s32.totalorder %s251, %s252
      %p264 = scmp.eq.s32.totalorder %s32, 3
      %p265 = por %p263, %p264
      %p267 = scmp.ne.s32.totalorder %s252, %s266
      %p268 = scmp.eq.s32.totalorder %s32, 0
      %p269 = por %p267, %p268
      %s271 = sadd.s32 %s270, 1
      %p274 = scmp.eq.s32.totalorder %s26, 3
      %p275 = scmp.ne.s32.totalorder %s270, %s272
      %p276 = scmp.eq.s32.totalorder %s26, 0
      %p277 = por %p275, %p276
      %p278 = scmp.ne.s32.totalorder %s270, %s272
      %p279 = scmp.eq.s32.totalorder %s31, 3
      %p280 = por %p278, %p279
      %p281 = scmp.ne.s32.totalorder %s272, %s273
      %p282 = scmp.eq.s32.totalorder %s31, 0
      %p283 = por %p281, %p282
      %p284 = scmp.ne.s32.totalorder %s272, %s273
      %p285 = scmp.eq.s32.totalorder %s32, 3
      %p286 = por %p284, %p285
      %p288 = scmp.ne.s32.totalorder %s273, %s287
      %p289 = scmp.eq.s32.totalorder %s32, 0
      %p290 = por %p288, %p289
      %s291 = ssub.s32 %s26, %s33
      %p292 = scmp.eq.s32.totalorder %s291, 0
      %s294 = sadd.s32 %s293, 1
      %s295 = scalar_select %p292, %s293, %s294
      %p298 = pneg %p292
      %p299 = scmp.eq.s32.totalorder %s26, 3
      %p300 = por %p298, %p299
      %p301 = scmp.ne.s32.totalorder %s293, %s296
      %p302 = scmp.eq.s32.totalorder %s26, 0
      %p303 = por %p301, %p302
      %p304 = scmp.ne.s32.totalorder %s293, %s296
      %p305 = scmp.eq.s32.totalorder %s31, 3
      %p306 = por %p304, %p305
      %p307 = scmp.ne.s32.totalorder %s296, %s297
      %p308 = scmp.eq.s32.totalorder %s31, 0
      %p309 = por %p307, %p308
      %p310 = scmp.ne.s32.totalorder %s296, %s297
      %p311 = scmp.eq.s32.totalorder %s32, 3
      %p312 = por %p310, %p311
      %p314 = scmp.ne.s32.totalorder %s297, %s313
      %p315 = scmp.eq.s32.totalorder %s32, 0
      %p316 = por %p314, %p315
      %p317 = scmp.le.s32.totalorder 1, %s26
      %p318 = scmp.lt.s32.totalorder %s26, 5
      %p319 = pnand %p317, %p318
      %p320 = pneg %p319
      // Predicated region
      $region9: #{tpu_custom_call.1} parent=5 // pred_check
        _
      $region10: #{tpu_custom_call.1} parent=5 // pred_check_branch
        %322 = sbr.rel (%p319) target = $region12
      $region11: #{tpu_custom_call.1} parent=5 // pred_region
        %s323 = ssub.s32 %s26, 1
        // Predicated region
        $region13: #{tpu_custom_call.1} parent=11 // pred_check
          %p324 = pneg %p73
        $region14: #{tpu_custom_call.1} parent=11 // pred_check_branch
          %326 = sbr.rel (%p324) target = $region16
        $region15: #{tpu_custom_call.1} parent=11 // pred_region
          _
        $region16: #{tpu_custom_call.1} parent=11 // pred_fallthru
          _
        // Predicated region
        $region17: #{tpu_custom_call.1} parent=11 // pred_check
          %p327 = pneg %p94
        $region18: #{tpu_custom_call.1} parent=11 // pred_check_branch
          %329 = sbr.rel (%p327) target = $region20
        $region19: #{tpu_custom_call.1} parent=11 // pred_region
          _
        $region20: #{tpu_custom_call.1} parent=11 // pred_fallthru
          _
        // Predicated region
        $region21: #{tpu_custom_call.1} parent=11 // pred_check
          %p330 = pneg %p115
        $region22: #{tpu_custom_call.1} parent=11 // pred_check_branch
          %332 = sbr.rel (%p330) target = $region24
        $region23: #{tpu_custom_call.1} parent=11 // pred_region
          _
        $region24: #{tpu_custom_call.1} parent=11 // pred_fallthru
          _
        // Predicated region
        $region25: #{tpu_custom_call.1} parent=11 // pred_check
          %p333 = pneg %p136
        $region26: #{tpu_custom_call.1} parent=11 // pred_check_branch
          %335 = sbr.rel (%p333) target = $region28
        $region27: #{tpu_custom_call.1} parent=11 // pred_region
          _
        $region28: #{tpu_custom_call.1} parent=11 // pred_fallthru
          _
        // Predicated region
        $region29: #{tpu_custom_call.1} parent=11 // pred_check
          %p336 = pneg %p157
        $region30: #{tpu_custom_call.1} parent=11 // pred_check_branch
          %338 = sbr.rel (%p336) target = $region32
        $region31: #{tpu_custom_call.1} parent=11 // pred_region
          _
        $region32: #{tpu_custom_call.1} parent=11 // pred_fallthru
          _
        // Predicated region
        $region33: #{tpu_custom_call.1} parent=11 // pred_check
          %p339 = pneg %p178
        $region34: #{tpu_custom_call.1} parent=11 // pred_check_branch
          %341 = sbr.rel (%p339) target = $region36
        $region35: #{tpu_custom_call.1} parent=11 // pred_region
          _
        $region36: #{tpu_custom_call.1} parent=11 // pred_fallthru
          _
        // Predicated region
        $region37: #{tpu_custom_call.1} parent=11 // pred_check
          %p342 = pneg %p199
        $region38: #{tpu_custom_call.1} parent=11 // pred_check_branch
          %344 = sbr.rel (%p342) target = $region40
        $region39: #{tpu_custom_call.1} parent=11 // pred_region
          _
        $region40: #{tpu_custom_call.1} parent=11 // pred_fallthru
          _
        // Predicated region
        $region41: #{tpu_custom_call.1} parent=11 // pred_check
          %p345 = pneg %p220
        $region42: #{tpu_custom_call.1} parent=11 // pred_check_branch
          %347 = sbr.rel (%p345) target = $region44
        $region43: #{tpu_custom_call.1} parent=11 // pred_region
          _
        $region44: #{tpu_custom_call.1} parent=11 // pred_fallthru
          _
        // Predicated region
        $region45: #{tpu_custom_call.1} parent=11 // pred_check
          %p348 = pneg %p241
        $region46: #{tpu_custom_call.1} parent=11 // pred_check_branch
          %350 = sbr.rel (%p348) target = $region48
        $region47: #{tpu_custom_call.1} parent=11 // pred_region
          _
        $region48: #{tpu_custom_call.1} parent=11 // pred_fallthru
          _
        // Predicated region
        $region49: #{tpu_custom_call.1} parent=11 // pred_check
          %p351 = pneg %p262
        $region50: #{tpu_custom_call.1} parent=11 // pred_check_branch
          %353 = sbr.rel (%p351) target = $region52
        $region51: #{tpu_custom_call.1} parent=11 // pred_region
          _
        $region52: #{tpu_custom_call.1} parent=11 // pred_fallthru
          _
        // Predicated region
        $region53: #{tpu_custom_call.1} parent=11 // pred_check
          %p354 = pneg %p283
        $region54: #{tpu_custom_call.1} parent=11 // pred_check_branch
          %356 = sbr.rel (%p354) target = $region56
        $region55: #{tpu_custom_call.1} parent=11 // pred_region
          _
        $region56: #{tpu_custom_call.1} parent=11 // pred_fallthru
          _
      $region12: #{tpu_custom_call.1} parent=5 // pred_fallthru
        _
      %p357 = scmp.lt.s32.totalorder %s26, 4
      // Predicated region
      $region57: #{tpu_custom_call.1} parent=5 // pred_check
        %p358 = pneg %p357
      $region58: #{tpu_custom_call.1} parent=5 // pred_check_branch
        %360 = sbr.rel (%p358) target = $region60
      $region59: #{tpu_custom_call.1} parent=5 // pred_region
        // Predicated region
        $region61: #{tpu_custom_call.1} parent=59 // pred_check
          %p361 = pneg %p46
        $region62: #{tpu_custom_call.1} parent=59 // pred_check_branch
          %363 = sbr.rel (%p361) target = $region64
        $region63: #{tpu_custom_call.1} parent=59 // pred_region
          %s364 = sand.u32 %s36, 1
          %s365 = scalar_lea.sflag [#allocation4], %s364
          %s366 = sand.u32 %s36, 1
          %s367 = smul.addr %s366, 32
          %s368 = scalar_lea.vmem [#allocation3], %s367
          %s369 = smul.u32 4, %s26
          %s371 = ssub.s32 512, 512
          %372 = vsyncadd %s365, %s371
          %s373 = smul.addr %s369, 128
          %s374 = scalar_lea.hbm %s0, %s373
          %s376 = sshll.u32 %s368, 4
          %s377 = int_to_ptr.vmem [resolvable:$true] %s376
          %379 = dma.hbm_to_vmem [thread:$0]  %s374, 512, %s377, %s365
        $region64: #{tpu_custom_call.1} parent=59 // pred_fallthru
          _
      $region60: #{tpu_custom_call.1} parent=5 // pred_fallthru
        _
      %p380 = scmp.le.s32.totalorder 1, %s26
      %p381 = scmp.lt.s32.totalorder %s26, 5
      %p382 = pnand %p380, %p381
      %p383 = pneg %p382
      // Predicated region
      $region65: #{tpu_custom_call.1} parent=5 // pred_check
        _
      $region66: #{tpu_custom_call.1} parent=5 // pred_check_branch
        %385 = sbr.rel (%p382) target = $region68
      $region67: #{tpu_custom_call.1} parent=5 // pred_region
        %s386 = ssub.s32 %s26, 1
        %s387 = sand.u32 %s39, 1
        %s388 = scalar_lea.sflag [#allocation4], %s387
        %s389 = sand.u32 %s39, 1
        %s390 = smul.addr %s389, 32
        %s391 = scalar_lea.vmem [#allocation3], %s390
        // Predicated region
        $region69: #{tpu_custom_call.1} parent=67 // pred_check
          %p392 = pneg %p52
        $region70: #{tpu_custom_call.1} parent=67 // pred_check_branch
          %394 = sbr.rel (%p392) target = $region72
        $region71: #{tpu_custom_call.1} parent=67 // pred_region
          %395 = dma.done %s388, 512
        $region72: #{tpu_custom_call.1} parent=67 // pred_fallthru
          _
        %s396 = sand.u32 %s39, 1
        %s397 = scalar_lea.sflag [#allocation4], %s396
        %s398 = sand.u32 %s39, 1
        %s399 = smul.addr %s398, 32
        %s400 = scalar_lea.vmem [#allocation3], %s399
        %p401 = pneg %p52
        %p402 = pneg %p49
        %p403 = pneg %p73
        %p404 = pneg %p70
        %p405 = pneg %p94
        %p406 = pneg %p91
        %p407 = pneg %p115
        %p408 = pneg %p112
        %p409 = pneg %p136
        %p410 = pneg %p133
        %p411 = pneg %p157
        %p412 = pneg %p154
        %p413 = pneg %p178
        %p414 = pneg %p175
        %p415 = pneg %p199
        %p416 = pneg %p196
        %p417 = pneg %p220
        %p418 = pneg %p217
        %p419 = pneg %p241
        %p420 = pneg %p238
        %p421 = pneg %p262
        %p422 = pneg %p259
        %p423 = pneg %p283
        %p424 = pneg %p280
        %p425 = pneg %p309
        %p426 = pneg %p306
        %s427 = sand.u32 %s296, 1
        %s428 = scalar_lea.sflag [#allocation5], %s427
        %s429 = sand.u32 %s296, 1
        %s430 = smul.addr %s429, 4
        %s431 = scalar_lea.vmem [#allocation6], %s430
        %s432 = smul.u32 4, %s31
        %s433 = smul.u32 4, %s31
        %v434 = vld [vmem:[%s391] sm:$0x3f]
        %v435 = vld [vmem:[%s391 + $0x8] sm:$0x3f]
        %v436 = vld [vmem:[%s391 + $0x10] sm:$0x3f]
        %v437 = vld [vmem:[%s391 + $0x18] sm:$0x3f]
        %v438 = vld [vmem:[%s1] sm:$0xff]
        %v439 = vld [vmem:[%s1 + $0x8] sm:$0xff]
        %v440 = vld [vmem:[%s1 + $0x10] sm:$0xff]
        %v441 = vld [vmem:[%s1 + $0x18] sm:$0xff]
        %v442 = vld [vmem:[%s2] sm:$0xff]
        %v443 = vld [vmem:[%s2 + $0x8] sm:$0xff]
        %v444 = vld [vmem:[%s2 + $0x10] sm:$0xff]
        %v445 = vld [vmem:[%s2 + $0x18] sm:$0xff]
        %447 = vset.pattern.permute.xlu0 0
        %448 = vperm.xlu0 %447, %v442
        %v449 = vpop.permute.xlu0 %448
        %452 = vset.pattern.permute.xlu0 0
        %453 = vperm.xlu0 %452, %v443
        %v454 = vpop.permute.xlu0 %453
        %457 = vset.pattern.permute.xlu0 0
        %458 = vperm.xlu0 %457, %v444
        %v459 = vpop.permute.xlu0 %458
        %462 = vset.pattern.permute.xlu0 0
        %463 = vperm.xlu0 %462, %v445
        %v464 = vpop.permute.xlu0 %463
        %vm466 = vcmask 48128
        %v468 = vsel %vm466, %v438, 0
        %v471 = vsel %vm466, %v439, 0
        %v474 = vsel %vm466, %v440, 0
        %v477 = vsel %vm466, %v441, 0
        %vm479 = vcmask 1045504
        %v481 = vsel %vm479, %v434, 0
        %v484 = vsel %vm479, %v435, 0
        %v487 = vsel %vm479, %v436, 0
        %v490 = vsel %vm479, %v437, 0
        %492 = vmatprep.subr.mxu0 0.0
        %493 = vmatpush1.msra.mxu0 0.0
        %494 = vmatprep.subr.mxu0 0.0
        %495 = vmatpush1.msra.mxu0 0.0
        %496 = vmatprep.subr.mxu0 0.0
        %497 = vmatpush1.msra.mxu0 0.0
        %498 = vmatprep.subr.mxu0 0.0
        %499 = vmatpush1.msra.mxu0 0.0
        %500 = vmatprep.subr.mxu0 0.0
        %501 = vmatpush1.msra.mxu0 0.0
        %502 = vmatprep.subr.mxu0 0.0
        %503 = vmatpush1.msra.mxu0 0.0
        %504 = vmatprep.subr.mxu0 0.0
        %505 = vmatpush1.msra.mxu0 0.0
        %506 = vmatprep.subr.mxu0 0.0
        %507 = vmatpush1.msra.mxu0 0.0
        %508 = vmatprep.subr.mxu0 0.0
        %509 = vmatpush1.msra.mxu0 0.0
        %510 = vmatprep.subr.mxu0 0.0
        %511 = vmatpush1.msra.mxu0 0.0
        %512 = vmatprep.subr.mxu0 0.0
        %513 = vmatpush1.msra.mxu0 0.0
        %514 = vmatprep.subr.mxu0 0.0
        %515 = vmatpush1.msra.mxu0 0.0
        %516 = vmatprep.subr.mxu0 0.0
        %517 = vmatpush1.msra.mxu0 0.0
        %518 = vmatprep.subr.mxu0 0.0
        %519 = vmatpush1.msra.mxu0 0.0
        %520 = vmatprep.subr.mxu0 0.0
        %521 = vmatpush1.msra.mxu0 0.0
        %522 = vmatprep.subr.mxu0 %v484
        %523 = vmatpush1.msra.mxu0 %v481
        %524 = vmatprep.subr.mxu0 0.0
        %525 = vmatpush2.msra.mxu0 0.0
        %526 = vmatprep.subr.mxu0 0.0
        %527 = vmatpush2.msra.mxu0 0.0
        %528 = vmatprep.subr.mxu0 0.0
        %529 = vmatpush2.msra.mxu0 0.0
        %530 = vmatprep.subr.mxu0 0.0
        %531 = vmatpush2.msra.mxu0 0.0
        %532 = vmatprep.subr.mxu0 0.0
        %533 = vmatpush2.msra.mxu0 0.0
        %534 = vmatprep.subr.mxu0 0.0
        %535 = vmatpush2.msra.mxu0 0.0
        %536 = vmatprep.subr.mxu0 0.0
        %537 = vmatpush2.msra.mxu0 0.0
        %538 = vmatprep.subr.mxu0 0.0
        %539 = vmatpush2.msra.mxu0 0.0
        %540 = vmatprep.subr.mxu0 0.0
        %541 = vmatpush2.msra.mxu0 0.0
        %542 = vmatprep.subr.mxu0 0.0
        %543 = vmatpush2.msra.mxu0 0.0
        %544 = vmatprep.subr.mxu0 0.0
        %545 = vmatpush2.msra.mxu0 0.0
        %546 = vmatprep.subr.mxu0 0.0
        %547 = vmatpush2.msra.mxu0 0.0
        %548 = vmatprep.subr.mxu0 0.0
        %549 = vmatpush2.msra.mxu0 0.0
        %550 = vmatprep.subr.mxu0 0.0
        %551 = vmatpush2.msra.mxu0 0.0
        %552 = vmatprep.subr.mxu0 0.0
        %553 = vmatpush2.msra.mxu0 0.0
        %554 = vmatprep.subr.mxu0 0.0
        %555 = vmatpush2.msra.mxu0 0.0
        %556 = vmatprep.mubr.f32.mxu0 0.0
        %557 = vmatmul.mubr.f32.gmra.mxu0 %v468
        %v558 = vpop.f32.mrf.mxu0
        %v559 = vadd.f32 %v449, %v558
        %v560 = vpop.f32.mrf.mxu0
        %v561 = vadd.f32 %v449, %v560
        %562 = vmatprep.mubr.f32.mxu0 0.0
        %563 = vmatmul.mubr.f32.gmra.mxu0 %v471
        %v564 = vpop.f32.mrf.mxu0
        %v565 = vadd.f32 %v454, %v564
        %v566 = vpop.f32.mrf.mxu0
        %v567 = vadd.f32 %v454, %v566
        %568 = vmatprep.mubr.f32.mxu0 0.0
        %569 = vmatmul.mubr.f32.gmra.mxu0 %v474
        %v570 = vpop.f32.mrf.mxu0
        %v571 = vadd.f32 %v459, %v570
        %v572 = vpop.f32.mrf.mxu0
        %v573 = vadd.f32 %v459, %v572
        %574 = vmatprep.mubr.f32.mxu0 0.0
        %575 = vmatmul.mubr.f32.gmra.mxu0 %v477
        %v576 = vpop.f32.mrf.mxu0
        %v577 = vadd.f32 %v464, %v576
        %v578 = vpop.f32.mrf.mxu0
        %v579 = vadd.f32 %v464, %v578
        %580 = vdwg.mxu0
        %581 = vmatprep.subr.mxu0 0.0
        %582 = vmatpush1.msra.mxu0 0.0
        %583 = vmatprep.subr.mxu0 0.0
        %584 = vmatpush1.msra.mxu0 0.0
        %585 = vmatprep.subr.mxu0 0.0
        %586 = vmatpush1.msra.mxu0 0.0
        %587 = vmatprep.subr.mxu0 0.0
        %588 = vmatpush1.msra.mxu0 0.0
        %589 = vmatprep.subr.mxu0 0.0
        %590 = vmatpush1.msra.mxu0 0.0
        %591 = vmatprep.subr.mxu0 0.0
        %592 = vmatpush1.msra.mxu0 0.0
        %593 = vmatprep.subr.mxu0 0.0
        %594 = vmatpush1.msra.mxu0 0.0
        %595 = vmatprep.subr.mxu0 0.0
        %596 = vmatpush1.msra.mxu0 0.0
        %597 = vmatprep.subr.mxu0 0.0
        %598 = vmatpush1.msra.mxu0 0.0
        %599 = vmatprep.subr.mxu0 0.0
        %600 = vmatpush1.msra.mxu0 0.0
        %601 = vmatprep.subr.mxu0 0.0
        %602 = vmatpush1.msra.mxu0 0.0
        %603 = vmatprep.subr.mxu0 0.0
        %604 = vmatpush1.msra.mxu0 0.0
        %605 = vmatprep.subr.mxu0 0.0
        %606 = vmatpush1.msra.mxu0 0.0
        %607 = vmatprep.subr.mxu0 0.0
        %608 = vmatpush1.msra.mxu0 0.0
        %609 = vmatprep.subr.mxu0 0.0
        %610 = vmatpush1.msra.mxu0 0.0
        %611 = vmatprep.subr.mxu0 %v490
        %612 = vmatpush1.msra.mxu0 %v487
        %613 = vmatprep.subr.mxu0 0.0
        %614 = vmatpush2.msra.mxu0 0.0
        %615 = vmatprep.subr.mxu0 0.0
        %616 = vmatpush2.msra.mxu0 0.0
        %617 = vmatprep.subr.mxu0 0.0
        %618 = vmatpush2.msra.mxu0 0.0
        %619 = vmatprep.subr.mxu0 0.0
        %620 = vmatpush2.msra.mxu0 0.0
        %621 = vmatprep.subr.mxu0 0.0
        %622 = vmatpush2.msra.mxu0 0.0
        %623 = vmatprep.subr.mxu0 0.0
        %624 = vmatpush2.msra.mxu0 0.0
        %625 = vmatprep.subr.mxu0 0.0
        %626 = vmatpush2.msra.mxu0 0.0
        %627 = vmatprep.subr.mxu0 0.0
        %628 = vmatpush2.msra.mxu0 0.0
        %629 = vmatprep.subr.mxu0 0.0
        %630 = vmatpush2.msra.mxu0 0.0
        %631 = vmatprep.subr.mxu0 0.0
        %632 = vmatpush2.msra.mxu0 0.0
        %633 = vmatprep.subr.mxu0 0.0
        %634 = vmatpush2.msra.mxu0 0.0
        %635 = vmatprep.subr.mxu0 0.0
        %636 = vmatpush2.msra.mxu0 0.0
        %637 = vmatprep.subr.mxu0 0.0
        %638 = vmatpush2.msra.mxu0 0.0
        %639 = vmatprep.subr.mxu0 0.0
        %640 = vmatpush2.msra.mxu0 0.0
        %641 = vmatprep.subr.mxu0 0.0
        %642 = vmatpush2.msra.mxu0 0.0
        %643 = vmatprep.subr.mxu0 0.0
        %644 = vmatpush2.msra.mxu0 0.0
        %645 = vmatprep.mubr.f32.mxu0 0.0
        %646 = vmatmul.mubr.f32.gmra.mxu0 %v468
        %v647 = vpop.f32.mrf.mxu0
        %v648 = vadd.f32 %v449, %v647
        %v649 = vpop.f32.mrf.mxu0
        %v650 = vadd.f32 %v449, %v649
        %651 = vmatprep.mubr.f32.mxu0 0.0
        %652 = vmatmul.mubr.f32.gmra.mxu0 %v471
        %v653 = vpop.f32.mrf.mxu0
        %v654 = vadd.f32 %v454, %v653
        %v655 = vpop.f32.mrf.mxu0
        %v656 = vadd.f32 %v454, %v655
        %657 = vmatprep.mubr.f32.mxu0 0.0
        %658 = vmatmul.mubr.f32.gmra.mxu0 %v474
        %v659 = vpop.f32.mrf.mxu0
        %v660 = vadd.f32 %v459, %v659
        %v661 = vpop.f32.mrf.mxu0
        %v662 = vadd.f32 %v459, %v661
        %663 = vmatprep.mubr.f32.mxu0 0.0
        %664 = vmatmul.mubr.f32.gmra.mxu0 %v477
        %v665 = vpop.f32.mrf.mxu0
        %v666 = vadd.f32 %v464, %v665
        %v667 = vpop.f32.mrf.mxu0
        %v668 = vadd.f32 %v464, %v667
        %669 = vdwg.mxu0
        %v670 = vmul.f32 %v559, 100.0
        %v671 = vmul.f32 %v561, 100.0
        %v672 = vmul.f32 %v648, 100.0
        %v673 = vmul.f32 %v650, 100.0
        %v674 = vmul.f32 %v565, 100.0
        %v675 = vmul.f32 %v567, 100.0
        %v676 = vmul.f32 %v654, 100.0
        %v677 = vmul.f32 %v656, 100.0
        %v678 = vmul.f32 %v571, 100.0
        %v679 = vmul.f32 %v573, 100.0
        %v680 = vmul.f32 %v660, 100.0
        %v681 = vmul.f32 %v662, 100.0
        %v682 = vmul.f32 %v577, 100.0
        %v683 = vmul.f32 %v579, 100.0
        %v684 = vmul.f32 %v666, 100.0
        %v685 = vmul.f32 %v668, 100.0
        %v686 = vmin.f32 %v670, 20.0
        %v687 = vmin.f32 %v671, 20.0
        %v688 = vmin.f32 %v672, 20.0
        %v689 = vmin.f32 %v673, 20.0
        %v690 = vmin.f32 %v674, 20.0
        %v691 = vmin.f32 %v675, 20.0
        %v692 = vmin.f32 %v676, 20.0
        %v693 = vmin.f32 %v677, 20.0
        %v694 = vmin.f32 %v678, 20.0
        %v695 = vmin.f32 %v679, 20.0
        %v696 = vmin.f32 %v680, 20.0
        %v697 = vmin.f32 %v681, 20.0
        %v698 = vmin.f32 %v682, 20.0
        %v699 = vmin.f32 %v683, 20.0
        %v700 = vmin.f32 %v684, 20.0
        %v701 = vmin.f32 %v685, 20.0
        %vm702 = vcmp.gt.f32.partialorder %v670, 20.0
        %vm703 = vcmp.gt.f32.partialorder %v671, 20.0
        %vm704 = vcmp.gt.f32.partialorder %v672, 20.0
        %vm705 = vcmp.gt.f32.partialorder %v673, 20.0
        %vm706 = vcmp.gt.f32.partialorder %v674, 20.0
        %vm707 = vcmp.gt.f32.partialorder %v675, 20.0
        %vm708 = vcmp.gt.f32.partialorder %v676, 20.0
        %vm709 = vcmp.gt.f32.partialorder %v677, 20.0
        %vm710 = vcmp.gt.f32.partialorder %v678, 20.0
        %vm711 = vcmp.gt.f32.partialorder %v679, 20.0
        %vm712 = vcmp.gt.f32.partialorder %v680, 20.0
        %vm713 = vcmp.gt.f32.partialorder %v681, 20.0
        %vm714 = vcmp.gt.f32.partialorder %v682, 20.0
        %vm715 = vcmp.gt.f32.partialorder %v683, 20.0
        %vm716 = vcmp.gt.f32.partialorder %v684, 20.0
        %vm717 = vcmp.gt.f32.partialorder %v685, 20.0
        %v718 = vmul.f32 %v686, 1.442695
        %v719 = vpow.pop %v718
        %v720 = vmul.f32 %v687, 1.442695
        %v721 = vpow.pop %v720
        %v722 = vmul.f32 %v688, 1.442695
        %v723 = vpow.pop %v722
        %v724 = vmul.f32 %v689, 1.442695
        %v725 = vpow.pop %v724
        %v726 = vmul.f32 %v690, 1.442695
        %v727 = vpow.pop %v726
        %v728 = vmul.f32 %v691, 1.442695
        %v729 = vpow.pop %v728
        %v730 = vmul.f32 %v692, 1.442695
        %v731 = vpow.pop %v730
        %v732 = vmul.f32 %v693, 1.442695
        %v733 = vpow.pop %v732
        %v734 = vmul.f32 %v694, 1.442695
        %v735 = vpow.pop %v734
        %v736 = vmul.f32 %v695, 1.442695
        %v737 = vpow.pop %v736
        %v738 = vmul.f32 %v696, 1.442695
        %v739 = vpow.pop %v738
        %v740 = vmul.f32 %v697, 1.442695
        %v741 = vpow.pop %v740
        %v742 = vmul.f32 %v698, 1.442695
        %v743 = vpow.pop %v742
        %v744 = vmul.f32 %v699, 1.442695
        %v745 = vpow.pop %v744
        %v746 = vmul.f32 %v700, 1.442695
        %v747 = vpow.pop %v746
        %v748 = vmul.f32 %v701, 1.442695
        %v749 = vpow.pop %v748
        %v750 = vadd.f32 %v719, 1.0
        %v751 = vlog2.pop %v750
        %v752 = vmul.f32 %v751, 0.6931472
        %v753 = vmul.f32 -0.5, %v719
        %v754 = vadd.f32 %v753, 1.0
        %v755 = vmul.f32 %v754, %v719
        %v756 = vand.u32 2147483647, %v719
        %vm757 = vcmp.lt.f32.partialorder %v756, 0.0004427343
        %v758 = vsel %vm757, %v755, %v752
        %v759 = vadd.f32 %v721, 1.0
        %v760 = vlog2.pop %v759
        %v761 = vmul.f32 %v760, 0.6931472
        %v762 = vmul.f32 -0.5, %v721
        %v763 = vadd.f32 %v762, 1.0
        %v764 = vmul.f32 %v763, %v721
        %v765 = vand.u32 2147483647, %v721
        %vm766 = vcmp.lt.f32.partialorder %v765, 0.0004427343
        %v767 = vsel %vm766, %v764, %v761
        %v768 = vadd.f32 %v723, 1.0
        %v769 = vlog2.pop %v768
        %v770 = vmul.f32 %v769, 0.6931472
        %v771 = vmul.f32 -0.5, %v723
        %v772 = vadd.f32 %v771, 1.0
        %v773 = vmul.f32 %v772, %v723
        %v774 = vand.u32 2147483647, %v723
        %vm775 = vcmp.lt.f32.partialorder %v774, 0.0004427343
        %v776 = vsel %vm775, %v773, %v770
        %v777 = vadd.f32 %v725, 1.0
        %v778 = vlog2.pop %v777
        %v779 = vmul.f32 %v778, 0.6931472
        %v780 = vmul.f32 -0.5, %v725
        %v781 = vadd.f32 %v780, 1.0
        %v782 = vmul.f32 %v781, %v725
        %v783 = vand.u32 2147483647, %v725
        %vm784 = vcmp.lt.f32.partialorder %v783, 0.0004427343
        %v785 = vsel %vm784, %v782, %v779
        %v786 = vadd.f32 %v727, 1.0
        %v787 = vlog2.pop %v786
        %v788 = vmul.f32 %v787, 0.6931472
        %v789 = vmul.f32 -0.5, %v727
        %v790 = vadd.f32 %v789, 1.0
        %v791 = vmul.f32 %v790, %v727
        %v792 = vand.u32 2147483647, %v727
        %vm793 = vcmp.lt.f32.partialorder %v792, 0.0004427343
        %v794 = vsel %vm793, %v791, %v788
        %v795 = vadd.f32 %v729, 1.0
        %v796 = vlog2.pop %v795
        %v797 = vmul.f32 %v796, 0.6931472
        %v798 = vmul.f32 -0.5, %v729
        %v799 = vadd.f32 %v798, 1.0
        %v800 = vmul.f32 %v799, %v729
        %v801 = vand.u32 2147483647, %v729
        %vm802 = vcmp.lt.f32.partialorder %v801, 0.0004427343
        %v803 = vsel %vm802, %v800, %v797
        %v804 = vadd.f32 %v731, 1.0
        %v805 = vlog2.pop %v804
        %v806 = vmul.f32 %v805, 0.6931472
        %v807 = vmul.f32 -0.5, %v731
        %v808 = vadd.f32 %v807, 1.0
        %v809 = vmul.f32 %v808, %v731
        %v810 = vand.u32 2147483647, %v731
        %vm811 = vcmp.lt.f32.partialorder %v810, 0.0004427343
        %v812 = vsel %vm811, %v809, %v806
        %v813 = vadd.f32 %v733, 1.0
        %v814 = vlog2.pop %v813
        %v815 = vmul.f32 %v814, 0.6931472
        %v816 = vmul.f32 -0.5, %v733
        %v817 = vadd.f32 %v816, 1.0
        %v818 = vmul.f32 %v817, %v733
        %v819 = vand.u32 2147483647, %v733
        %vm820 = vcmp.lt.f32.partialorder %v819, 0.0004427343
        %v821 = vsel %vm820, %v818, %v815
        %v822 = vadd.f32 %v735, 1.0
        %v823 = vlog2.pop %v822
        %v824 = vmul.f32 %v823, 0.6931472
        %v825 = vmul.f32 -0.5, %v735
        %v826 = vadd.f32 %v825, 1.0
        %v827 = vmul.f32 %v826, %v735
        %v828 = vand.u32 2147483647, %v735
        %vm829 = vcmp.lt.f32.partialorder %v828, 0.0004427343
        %v830 = vsel %vm829, %v827, %v824
        %v831 = vadd.f32 %v737, 1.0
        %v832 = vlog2.pop %v831
        %v833 = vmul.f32 %v832, 0.6931472
        %v834 = vmul.f32 -0.5, %v737
        %v835 = vadd.f32 %v834, 1.0
        %v836 = vmul.f32 %v835, %v737
        %v837 = vand.u32 2147483647, %v737
        %vm838 = vcmp.lt.f32.partialorder %v837, 0.0004427343
        %v839 = vsel %vm838, %v836, %v833
        %v840 = vadd.f32 %v739, 1.0
        %v841 = vlog2.pop %v840
        %v842 = vmul.f32 %v841, 0.6931472
        %v843 = vmul.f32 -0.5, %v739
        %v844 = vadd.f32 %v843, 1.0
        %v845 = vmul.f32 %v844, %v739
        %v846 = vand.u32 2147483647, %v739
        %vm847 = vcmp.lt.f32.partialorder %v846, 0.0004427343
        %v848 = vsel %vm847, %v845, %v842
        %v849 = vadd.f32 %v741, 1.0
        %v850 = vlog2.pop %v849
        %v851 = vmul.f32 %v850, 0.6931472
        %v852 = vmul.f32 -0.5, %v741
        %v853 = vadd.f32 %v852, 1.0
        %v854 = vmul.f32 %v853, %v741
        %v855 = vand.u32 2147483647, %v741
        %vm856 = vcmp.lt.f32.partialorder %v855, 0.0004427343
        %v857 = vsel %vm856, %v854, %v851
        %v858 = vadd.f32 %v743, 1.0
        %v859 = vlog2.pop %v858
        %v860 = vmul.f32 %v859, 0.6931472
        %v861 = vmul.f32 -0.5, %v743
        %v862 = vadd.f32 %v861, 1.0
        %v863 = vmul.f32 %v862, %v743
        %v864 = vand.u32 2147483647, %v743
        %vm865 = vcmp.lt.f32.partialorder %v864, 0.0004427343
        %v866 = vsel %vm865, %v863, %v860
        %v867 = vadd.f32 %v745, 1.0
        %v868 = vlog2.pop %v867
        %v869 = vmul.f32 %v868, 0.6931472
        %v870 = vmul.f32 -0.5, %v745
        %v871 = vadd.f32 %v870, 1.0
        %v872 = vmul.f32 %v871, %v745
        %v873 = vand.u32 2147483647, %v745
        %vm874 = vcmp.lt.f32.partialorder %v873, 0.0004427343
        %v875 = vsel %vm874, %v872, %v869
        %v876 = vadd.f32 %v747, 1.0
        %v877 = vlog2.pop %v876
        %v878 = vmul.f32 %v877, 0.6931472
        %v879 = vmul.f32 -0.5, %v747
        %v880 = vadd.f32 %v879, 1.0
        %v881 = vmul.f32 %v880, %v747
        %v882 = vand.u32 2147483647, %v747
        %vm883 = vcmp.lt.f32.partialorder %v882, 0.0004427343
        %v884 = vsel %vm883, %v881, %v878
        %v885 = vadd.f32 %v749, 1.0
        %v886 = vlog2.pop %v885
        %v887 = vmul.f32 %v886, 0.6931472
        %v888 = vmul.f32 -0.5, %v749
        %v889 = vadd.f32 %v888, 1.0
        %v890 = vmul.f32 %v889, %v749
        %v891 = vand.u32 2147483647, %v749
        %vm892 = vcmp.lt.f32.partialorder %v891, 0.0004427343
        %v893 = vsel %vm892, %v890, %v887
        %v894 = vmul.f32 %v758, 0.01
        %v895 = vmul.f32 %v767, 0.01
        %v896 = vmul.f32 %v776, 0.01
        %v897 = vmul.f32 %v785, 0.01
        %v898 = vmul.f32 %v794, 0.01
        %v899 = vmul.f32 %v803, 0.01
        %v900 = vmul.f32 %v812, 0.01
        %v901 = vmul.f32 %v821, 0.01
        %v902 = vmul.f32 %v830, 0.01
        %v903 = vmul.f32 %v839, 0.01
        %v904 = vmul.f32 %v848, 0.01
        %v905 = vmul.f32 %v857, 0.01
        %v906 = vmul.f32 %v866, 0.01
        %v907 = vmul.f32 %v875, 0.01
        %v908 = vmul.f32 %v884, 0.01
        %v909 = vmul.f32 %v893, 0.01
        %v910 = vsel %vm702, %v559, %v894
        %v911 = vsel %vm703, %v561, %v895
        %v912 = vsel %vm704, %v648, %v896
        %v913 = vsel %vm705, %v650, %v897
        %v914 = vsel %vm706, %v565, %v898
        %v915 = vsel %vm707, %v567, %v899
        %v916 = vsel %vm708, %v654, %v900
        %v917 = vsel %vm709, %v656, %v901
        %v918 = vsel %vm710, %v571, %v902
        %v919 = vsel %vm711, %v573, %v903
        %v920 = vsel %vm712, %v660, %v904
        %v921 = vsel %vm713, %v662, %v905
        %v922 = vsel %vm714, %v577, %v906
        %v923 = vsel %vm715, %v579, %v907
        %v924 = vsel %vm716, %v666, %v908
        %v925 = vsel %vm717, %v668, %v909
        %v926 = vld [vmem:[%s3] sm:$0xff]
        %v927 = vld [vmem:[%s3 + $0x8] sm:$0xff]
        %v928 = vld [vmem:[%s3 + $0x10] sm:$0xff]
        %v929 = vld [vmem:[%s3 + $0x18] sm:$0x3]
        %v930 = vld [vmem:[%s4] sm:$0xff]
        %v931 = vld [vmem:[%s4 + $0x8] sm:$0xff]
        %v932 = vld [vmem:[%s4 + $0x10] sm:$0xff]
        %v933 = vld [vmem:[%s4 + $0x18] sm:$0x3]
        %935 = vset.pattern.permute.xlu0 0
        %936 = vperm.xlu0 %935, %v930
        %v937 = vpop.permute.xlu0 %936
        %940 = vset.pattern.permute.xlu0 0
        %941 = vperm.xlu0 %940, %v931
        %v942 = vpop.permute.xlu0 %941
        %945 = vset.pattern.permute.xlu0 0
        %946 = vperm.xlu0 %945, %v932
        %v947 = vpop.permute.xlu0 %946
        %950 = vset.pattern.permute.xlu0 0
        %951 = vperm.xlu0 %950, %v933
        %v952 = vpop.permute.xlu0 %951
        %vm954 = vcmask 261120
        %v956 = vsel %vm954, %v926, 0
        %v959 = vsel %vm954, %v927, 0
        %v962 = vsel %vm954, %v928, 0
        %v965 = vsel %vm954, %v929, 0
        %967 = vmatprep.subr.mxu0 0.0
        %968 = vmatpush1.msra.mxu0 0.0
        %969 = vmatprep.subr.mxu0 0.0
        %970 = vmatpush1.msra.mxu0 0.0
        %971 = vmatprep.subr.mxu0 0.0
        %972 = vmatpush1.msra.mxu0 0.0
        %973 = vmatprep.subr.mxu0 0.0
        %974 = vmatpush1.msra.mxu0 0.0
        %975 = vmatprep.subr.mxu0 0.0
        %976 = vmatpush1.msra.mxu0 0.0
        %977 = vmatprep.subr.mxu0 0.0
        %978 = vmatpush1.msra.mxu0 0.0
        %979 = vmatprep.subr.mxu0 0.0
        %980 = vmatpush1.msra.mxu0 0.0
        %981 = vmatprep.subr.mxu0 0.0
        %982 = vmatpush1.msra.mxu0 0.0
        %983 = vmatprep.subr.mxu0 0.0
        %984 = vmatpush1.msra.mxu0 0.0
        %985 = vmatprep.subr.mxu0 0.0
        %986 = vmatpush1.msra.mxu0 0.0
        %987 = vmatprep.subr.mxu0 0.0
        %988 = vmatpush1.msra.mxu0 0.0
        %989 = vmatprep.subr.mxu0 0.0
        %990 = vmatpush1.msra.mxu0 0.0
        %991 = vmatprep.subr.mxu0 %v923
        %992 = vmatpush1.msra.mxu0 %v922
        %993 = vmatprep.subr.mxu0 %v919
        %994 = vmatpush1.msra.mxu0 %v918
        %995 = vmatprep.subr.mxu0 %v915
        %996 = vmatpush1.msra.mxu0 %v914
        %997 = vmatprep.subr.mxu0 %v911
        %998 = vmatpush1.msra.mxu0 %v910
        %999 = vmatprep.subr.mxu0 0.0
        %1000 = vmatpush2.msra.mxu0 0.0
        %1001 = vmatprep.subr.mxu0 0.0
        %1002 = vmatpush2.msra.mxu0 0.0
        %1003 = vmatprep.subr.mxu0 0.0
        %1004 = vmatpush2.msra.mxu0 0.0
        %1005 = vmatprep.subr.mxu0 0.0
        %1006 = vmatpush2.msra.mxu0 0.0
        %1007 = vmatprep.subr.mxu0 0.0
        %1008 = vmatpush2.msra.mxu0 0.0
        %1009 = vmatprep.subr.mxu0 0.0
        %1010 = vmatpush2.msra.mxu0 0.0
        %1011 = vmatprep.subr.mxu0 0.0
        %1012 = vmatpush2.msra.mxu0 0.0
        %1013 = vmatprep.subr.mxu0 0.0
        %1014 = vmatpush2.msra.mxu0 0.0
        %1015 = vmatprep.subr.mxu0 0.0
        %1016 = vmatpush2.msra.mxu0 0.0
        %1017 = vmatprep.subr.mxu0 0.0
        %1018 = vmatpush2.msra.mxu0 0.0
        %1019 = vmatprep.subr.mxu0 0.0
        %1020 = vmatpush2.msra.mxu0 0.0
        %1021 = vmatprep.subr.mxu0 0.0
        %1022 = vmatpush2.msra.mxu0 0.0
        %1023 = vmatprep.subr.mxu0 0.0
        %1024 = vmatpush2.msra.mxu0 0.0
        %1025 = vmatprep.subr.mxu0 0.0
        %1026 = vmatpush2.msra.mxu0 0.0
        %1027 = vmatprep.subr.mxu0 0.0
        %1028 = vmatpush2.msra.mxu0 0.0
        %1029 = vmatprep.subr.mxu0 0.0
        %1030 = vmatpush2.msra.mxu0 0.0
        %1031 = vmatprep.mubr.f32.mxu0 0.0
        %1032 = vmatmul.mubr.f32.gmra.mxu0 %v956
        %v1033 = vpop.f32.mrf.mxu0
        %v1034 = vadd.f32 %v937, %v1033
        %v1035 = vpop.f32.mrf.mxu0
        %v1036 = vadd.f32 %v937, %v1035
        %1037 = vmatprep.mubr.f32.mxu0 0.0
        %1038 = vmatmul.mubr.f32.gmra.mxu0 %v959
        %v1039 = vpop.f32.mrf.mxu0
        %v1040 = vadd.f32 %v942, %v1039
        %v1041 = vpop.f32.mrf.mxu0
        %v1042 = vadd.f32 %v942, %v1041
        %1043 = vmatprep.mubr.f32.mxu0 0.0
        %1044 = vmatmul.mubr.f32.gmra.mxu0 %v962
        %v1045 = vpop.f32.mrf.mxu0
        %v1046 = vadd.f32 %v947, %v1045
        %v1047 = vpop.f32.mrf.mxu0
        %v1048 = vadd.f32 %v947, %v1047
        %1049 = vmatprep.mubr.f32.mxu0 0.0
        %1050 = vmatmul.mubr.f32.gmra.mxu0 %v965
        %v1051 = vpop.f32.mrf.mxu0
        %v1052 = vadd.f32 %v952, %v1051
        %v1053 = vpop.f32.mrf.mxu0
        %v1054 = vadd.f32 %v952, %v1053
        %1055 = vdwg.mxu0
        %1056 = vmatprep.subr.mxu0 0.0
        %1057 = vmatpush1.msra.mxu0 0.0
        %1058 = vmatprep.subr.mxu0 0.0
        %1059 = vmatpush1.msra.mxu0 0.0
        %1060 = vmatprep.subr.mxu0 0.0
        %1061 = vmatpush1.msra.mxu0 0.0
        %1062 = vmatprep.subr.mxu0 0.0
        %1063 = vmatpush1.msra.mxu0 0.0
        %1064 = vmatprep.subr.mxu0 0.0
        %1065 = vmatpush1.msra.mxu0 0.0
        %1066 = vmatprep.subr.mxu0 0.0
        %1067 = vmatpush1.msra.mxu0 0.0
        %1068 = vmatprep.subr.mxu0 0.0
        %1069 = vmatpush1.msra.mxu0 0.0
        %1070 = vmatprep.subr.mxu0 0.0
        %1071 = vmatpush1.msra.mxu0 0.0
        %1072 = vmatprep.subr.mxu0 0.0
        %1073 = vmatpush1.msra.mxu0 0.0
        %1074 = vmatprep.subr.mxu0 0.0
        %1075 = vmatpush1.msra.mxu0 0.0
        %1076 = vmatprep.subr.mxu0 0.0
        %1077 = vmatpush1.msra.mxu0 0.0
        %1078 = vmatprep.subr.mxu0 0.0
        %1079 = vmatpush1.msra.mxu0 0.0
        %1080 = vmatprep.subr.mxu0 %v925
        %1081 = vmatpush1.msra.mxu0 %v924
        %1082 = vmatprep.subr.mxu0 %v921
        %1083 = vmatpush1.msra.mxu0 %v920
        %1084 = vmatprep.subr.mxu0 %v917
        %1085 = vmatpush1.msra.mxu0 %v916
        %1086 = vmatprep.subr.mxu0 %v913
        %1087 = vmatpush1.msra.mxu0 %v912
        %1088 = vmatprep.subr.mxu0 0.0
        %1089 = vmatpush2.msra.mxu0 0.0
        %1090 = vmatprep.subr.mxu0 0.0
        %1091 = vmatpush2.msra.mxu0 0.0
        %1092 = vmatprep.subr.mxu0 0.0
        %1093 = vmatpush2.msra.mxu0 0.0
        %1094 = vmatprep.subr.mxu0 0.0
        %1095 = vmatpush2.msra.mxu0 0.0
        %1096 = vmatprep.subr.mxu0 0.0
        %1097 = vmatpush2.msra.mxu0 0.0
        %1098 = vmatprep.subr.mxu0 0.0
        %1099 = vmatpush2.msra.mxu0 0.0
        %1100 = vmatprep.subr.mxu0 0.0
        %1101 = vmatpush2.msra.mxu0 0.0
        %1102 = vmatprep.subr.mxu0 0.0
        %1103 = vmatpush2.msra.mxu0 0.0
        %1104 = vmatprep.subr.mxu0 0.0
        %1105 = vmatpush2.msra.mxu0 0.0
        %1106 = vmatprep.subr.mxu0 0.0
        %1107 = vmatpush2.msra.mxu0 0.0
        %1108 = vmatprep.subr.mxu0 0.0
        %1109 = vmatpush2.msra.mxu0 0.0
        %1110 = vmatprep.subr.mxu0 0.0
        %1111 = vmatpush2.msra.mxu0 0.0
        %1112 = vmatprep.subr.mxu0 0.0
        %1113 = vmatpush2.msra.mxu0 0.0
        %1114 = vmatprep.subr.mxu0 0.0
        %1115 = vmatpush2.msra.mxu0 0.0
        %1116 = vmatprep.subr.mxu0 0.0
        %1117 = vmatpush2.msra.mxu0 0.0
        %1118 = vmatprep.subr.mxu0 0.0
        %1119 = vmatpush2.msra.mxu0 0.0
        %1120 = vmatprep.mubr.f32.mxu0 0.0
        %1121 = vmatmul.mubr.f32.gmra.mxu0 %v956
        %v1122 = vpop.f32.mrf.mxu0
        %v1123 = vadd.f32 %v937, %v1122
        %v1124 = vpop.f32.mrf.mxu0
        %v1125 = vadd.f32 %v937, %v1124
        %1126 = vmatprep.mubr.f32.mxu0 0.0
        %1127 = vmatmul.mubr.f32.gmra.mxu0 %v959
        %v1128 = vpop.f32.mrf.mxu0
        %v1129 = vadd.f32 %v942, %v1128
        %v1130 = vpop.f32.mrf.mxu0
        %v1131 = vadd.f32 %v942, %v1130
        %1132 = vmatprep.mubr.f32.mxu0 0.0
        %1133 = vmatmul.mubr.f32.gmra.mxu0 %v962
        %v1134 = vpop.f32.mrf.mxu0
        %v1135 = vadd.f32 %v947, %v1134
        %v1136 = vpop.f32.mrf.mxu0
        %v1137 = vadd.f32 %v947, %v1136
        %1138 = vmatprep.mubr.f32.mxu0 0.0
        %1139 = vmatmul.mubr.f32.gmra.mxu0 %v965
        %v1140 = vpop.f32.mrf.mxu0
        %v1141 = vadd.f32 %v952, %v1140
        %v1142 = vpop.f32.mrf.mxu0
        %v1143 = vadd.f32 %v952, %v1142
        %1144 = vdwg.mxu0
        %v1145 = vmul.f32 %v1034, 100.0
        %v1146 = vmul.f32 %v1036, 100.0
        %v1147 = vmul.f32 %v1123, 100.0
        %v1148 = vmul.f32 %v1125, 100.0
        %v1149 = vmul.f32 %v1040, 100.0
        %v1150 = vmul.f32 %v1042, 100.0
        %v1151 = vmul.f32 %v1129, 100.0
        %v1152 = vmul.f32 %v1131, 100.0
        %v1153 = vmul.f32 %v1046, 100.0
        %v1154 = vmul.f32 %v1048, 100.0
        %v1155 = vmul.f32 %v1135, 100.0
        %v1156 = vmul.f32 %v1137, 100.0
        %v1157 = vmul.f32 %v1052, 100.0
        %v1158 = vmul.f32 %v1054, 100.0
        %v1159 = vmul.f32 %v1141, 100.0
        %v1160 = vmul.f32 %v1143, 100.0
        %v1161 = vmin.f32 %v1145, 20.0
        %v1162 = vmin.f32 %v1146, 20.0
        %v1163 = vmin.f32 %v1147, 20.0
        %v1164 = vmin.f32 %v1148, 20.0
        %v1165 = vmin.f32 %v1149, 20.0
        %v1166 = vmin.f32 %v1150, 20.0
        %v1167 = vmin.f32 %v1151, 20.0
        %v1168 = vmin.f32 %v1152, 20.0
        %v1169 = vmin.f32 %v1153, 20.0
        %v1170 = vmin.f32 %v1154, 20.0
        %v1171 = vmin.f32 %v1155, 20.0
        %v1172 = vmin.f32 %v1156, 20.0
        %v1173 = vmin.f32 %v1157, 20.0
        %v1174 = vmin.f32 %v1158, 20.0
        %v1175 = vmin.f32 %v1159, 20.0
        %v1176 = vmin.f32 %v1160, 20.0
        %vm1177 = vcmp.gt.f32.partialorder %v1145, 20.0
        %vm1178 = vcmp.gt.f32.partialorder %v1146, 20.0
        %vm1179 = vcmp.gt.f32.partialorder %v1147, 20.0
        %vm1180 = vcmp.gt.f32.partialorder %v1148, 20.0
        %vm1181 = vcmp.gt.f32.partialorder %v1149, 20.0
        %vm1182 = vcmp.gt.f32.partialorder %v1150, 20.0
        %vm1183 = vcmp.gt.f32.partialorder %v1151, 20.0
        %vm1184 = vcmp.gt.f32.partialorder %v1152, 20.0
        %vm1185 = vcmp.gt.f32.partialorder %v1153, 20.0
        %vm1186 = vcmp.gt.f32.partialorder %v1154, 20.0
        %vm1187 = vcmp.gt.f32.partialorder %v1155, 20.0
        %vm1188 = vcmp.gt.f32.partialorder %v1156, 20.0
        %vm1189 = vcmp.gt.f32.partialorder %v1157, 20.0
        %vm1190 = vcmp.gt.f32.partialorder %v1158, 20.0
        %vm1191 = vcmp.gt.f32.partialorder %v1159, 20.0
        %vm1192 = vcmp.gt.f32.partialorder %v1160, 20.0
        %v1193 = vmul.f32 %v1161, 1.442695
        %v1194 = vpow.pop %v1193
        %v1195 = vmul.f32 %v1162, 1.442695
        %v1196 = vpow.pop %v1195
        %v1197 = vmul.f32 %v1163, 1.442695
        %v1198 = vpow.pop %v1197
        %v1199 = vmul.f32 %v1164, 1.442695
        %v1200 = vpow.pop %v1199
        %v1201 = vmul.f32 %v1165, 1.442695
        %v1202 = vpow.pop %v1201
        %v1203 = vmul.f32 %v1166, 1.442695
        %v1204 = vpow.pop %v1203
        %v1205 = vmul.f32 %v1167, 1.442695
        %v1206 = vpow.pop %v1205
        %v1207 = vmul.f32 %v1168, 1.442695
        %v1208 = vpow.pop %v1207
        %v1209 = vmul.f32 %v1169, 1.442695
        %v1210 = vpow.pop %v1209
        %v1211 = vmul.f32 %v1170, 1.442695
        %v1212 = vpow.pop %v1211
        %v1213 = vmul.f32 %v1171, 1.442695
        %v1214 = vpow.pop %v1213
        %v1215 = vmul.f32 %v1172, 1.442695
        %v1216 = vpow.pop %v1215
        %v1217 = vmul.f32 %v1173, 1.442695
        %v1218 = vpow.pop %v1217
        %v1219 = vmul.f32 %v1174, 1.442695
        %v1220 = vpow.pop %v1219
        %v1221 = vmul.f32 %v1175, 1.442695
        %v1222 = vpow.pop %v1221
        %v1223 = vmul.f32 %v1176, 1.442695
        %v1224 = vpow.pop %v1223
        %v1225 = vadd.f32 %v1194, 1.0
        %v1226 = vlog2.pop %v1225
        %v1227 = vmul.f32 %v1226, 0.6931472
        %v1228 = vmul.f32 -0.5, %v1194
        %v1229 = vadd.f32 %v1228, 1.0
        %v1230 = vmul.f32 %v1229, %v1194
        %v1231 = vand.u32 2147483647, %v1194
        %vm1232 = vcmp.lt.f32.partialorder %v1231, 0.0004427343
        %v1233 = vsel %vm1232, %v1230, %v1227
        %v1234 = vadd.f32 %v1196, 1.0
        %v1235 = vlog2.pop %v1234
        %v1236 = vmul.f32 %v1235, 0.6931472
        %v1237 = vmul.f32 -0.5, %v1196
        %v1238 = vadd.f32 %v1237, 1.0
        %v1239 = vmul.f32 %v1238, %v1196
        %v1240 = vand.u32 2147483647, %v1196
        %vm1241 = vcmp.lt.f32.partialorder %v1240, 0.0004427343
        %v1242 = vsel %vm1241, %v1239, %v1236
        %v1243 = vadd.f32 %v1198, 1.0
        %v1244 = vlog2.pop %v1243
        %v1245 = vmul.f32 %v1244, 0.6931472
        %v1246 = vmul.f32 -0.5, %v1198
        %v1247 = vadd.f32 %v1246, 1.0
        %v1248 = vmul.f32 %v1247, %v1198
        %v1249 = vand.u32 2147483647, %v1198
        %vm1250 = vcmp.lt.f32.partialorder %v1249, 0.0004427343
        %v1251 = vsel %vm1250, %v1248, %v1245
        %v1252 = vadd.f32 %v1200, 1.0
        %v1253 = vlog2.pop %v1252
        %v1254 = vmul.f32 %v1253, 0.6931472
        %v1255 = vmul.f32 -0.5, %v1200
        %v1256 = vadd.f32 %v1255, 1.0
        %v1257 = vmul.f32 %v1256, %v1200
        %v1258 = vand.u32 2147483647, %v1200
        %vm1259 = vcmp.lt.f32.partialorder %v1258, 0.0004427343
        %v1260 = vsel %vm1259, %v1257, %v1254
        %v1261 = vadd.f32 %v1202, 1.0
        %v1262 = vlog2.pop %v1261
        %v1263 = vmul.f32 %v1262, 0.6931472
        %v1264 = vmul.f32 -0.5, %v1202
        %v1265 = vadd.f32 %v1264, 1.0
        %v1266 = vmul.f32 %v1265, %v1202
        %v1267 = vand.u32 2147483647, %v1202
        %vm1268 = vcmp.lt.f32.partialorder %v1267, 0.0004427343
        %v1269 = vsel %vm1268, %v1266, %v1263
        %v1270 = vadd.f32 %v1204, 1.0
        %v1271 = vlog2.pop %v1270
        %v1272 = vmul.f32 %v1271, 0.6931472
        %v1273 = vmul.f32 -0.5, %v1204
        %v1274 = vadd.f32 %v1273, 1.0
        %v1275 = vmul.f32 %v1274, %v1204
        %v1276 = vand.u32 2147483647, %v1204
        %vm1277 = vcmp.lt.f32.partialorder %v1276, 0.0004427343
        %v1278 = vsel %vm1277, %v1275, %v1272
        %v1279 = vadd.f32 %v1206, 1.0
        %v1280 = vlog2.pop %v1279
        %v1281 = vmul.f32 %v1280, 0.6931472
        %v1282 = vmul.f32 -0.5, %v1206
        %v1283 = vadd.f32 %v1282, 1.0
        %v1284 = vmul.f32 %v1283, %v1206
        %v1285 = vand.u32 2147483647, %v1206
        %vm1286 = vcmp.lt.f32.partialorder %v1285, 0.0004427343
        %v1287 = vsel %vm1286, %v1284, %v1281
        %v1288 = vadd.f32 %v1208, 1.0
        %v1289 = vlog2.pop %v1288
        %v1290 = vmul.f32 %v1289, 0.6931472
        %v1291 = vmul.f32 -0.5, %v1208
        %v1292 = vadd.f32 %v1291, 1.0
        %v1293 = vmul.f32 %v1292, %v1208
        %v1294 = vand.u32 2147483647, %v1208
        %vm1295 = vcmp.lt.f32.partialorder %v1294, 0.0004427343
        %v1296 = vsel %vm1295, %v1293, %v1290
        %v1297 = vadd.f32 %v1210, 1.0
        %v1298 = vlog2.pop %v1297
        %v1299 = vmul.f32 %v1298, 0.6931472
        %v1300 = vmul.f32 -0.5, %v1210
        %v1301 = vadd.f32 %v1300, 1.0
        %v1302 = vmul.f32 %v1301, %v1210
        %v1303 = vand.u32 2147483647, %v1210
        %vm1304 = vcmp.lt.f32.partialorder %v1303, 0.0004427343
        %v1305 = vsel %vm1304, %v1302, %v1299
        %v1306 = vadd.f32 %v1212, 1.0
        %v1307 = vlog2.pop %v1306
        %v1308 = vmul.f32 %v1307, 0.6931472
        %v1309 = vmul.f32 -0.5, %v1212
        %v1310 = vadd.f32 %v1309, 1.0
        %v1311 = vmul.f32 %v1310, %v1212
        %v1312 = vand.u32 2147483647, %v1212
        %vm1313 = vcmp.lt.f32.partialorder %v1312, 0.0004427343
        %v1314 = vsel %vm1313, %v1311, %v1308
        %v1315 = vadd.f32 %v1214, 1.0
        %v1316 = vlog2.pop %v1315
        %v1317 = vmul.f32 %v1316, 0.6931472
        %v1318 = vmul.f32 -0.5, %v1214
        %v1319 = vadd.f32 %v1318, 1.0
        %v1320 = vmul.f32 %v1319, %v1214
        %v1321 = vand.u32 2147483647, %v1214
        %vm1322 = vcmp.lt.f32.partialorder %v1321, 0.0004427343
        %v1323 = vsel %vm1322, %v1320, %v1317
        %v1324 = vadd.f32 %v1216, 1.0
        %v1325 = vlog2.pop %v1324
        %v1326 = vmul.f32 %v1325, 0.6931472
        %v1327 = vmul.f32 -0.5, %v1216
        %v1328 = vadd.f32 %v1327, 1.0
        %v1329 = vmul.f32 %v1328, %v1216
        %v1330 = vand.u32 2147483647, %v1216
        %vm1331 = vcmp.lt.f32.partialorder %v1330, 0.0004427343
        %v1332 = vsel %vm1331, %v1329, %v1326
        %v1333 = vadd.f32 %v1218, 1.0
        %v1334 = vlog2.pop %v1333
        %v1335 = vmul.f32 %v1334, 0.6931472
        %v1336 = vmul.f32 -0.5, %v1218
        %v1337 = vadd.f32 %v1336, 1.0
        %v1338 = vmul.f32 %v1337, %v1218
        %v1339 = vand.u32 2147483647, %v1218
        %vm1340 = vcmp.lt.f32.partialorder %v1339, 0.0004427343
        %v1341 = vsel %vm1340, %v1338, %v1335
        %v1342 = vadd.f32 %v1220, 1.0
        %v1343 = vlog2.pop %v1342
        %v1344 = vmul.f32 %v1343, 0.6931472
        %v1345 = vmul.f32 -0.5, %v1220
        %v1346 = vadd.f32 %v1345, 1.0
        %v1347 = vmul.f32 %v1346, %v1220
        %v1348 = vand.u32 2147483647, %v1220
        %vm1349 = vcmp.lt.f32.partialorder %v1348, 0.0004427343
        %v1350 = vsel %vm1349, %v1347, %v1344
        %v1351 = vadd.f32 %v1222, 1.0
        %v1352 = vlog2.pop %v1351
        %v1353 = vmul.f32 %v1352, 0.6931472
        %v1354 = vmul.f32 -0.5, %v1222
        %v1355 = vadd.f32 %v1354, 1.0
        %v1356 = vmul.f32 %v1355, %v1222
        %v1357 = vand.u32 2147483647, %v1222
        %vm1358 = vcmp.lt.f32.partialorder %v1357, 0.0004427343
        %v1359 = vsel %vm1358, %v1356, %v1353
        %v1360 = vadd.f32 %v1224, 1.0
        %v1361 = vlog2.pop %v1360
        %v1362 = vmul.f32 %v1361, 0.6931472
        %v1363 = vmul.f32 -0.5, %v1224
        %v1364 = vadd.f32 %v1363, 1.0
        %v1365 = vmul.f32 %v1364, %v1224
        %v1366 = vand.u32 2147483647, %v1224
        %vm1367 = vcmp.lt.f32.partialorder %v1366, 0.0004427343
        %v1368 = vsel %vm1367, %v1365, %v1362
        %v1369 = vmul.f32 %v1233, 0.01
        %v1370 = vmul.f32 %v1242, 0.01
        %v1371 = vmul.f32 %v1251, 0.01
        %v1372 = vmul.f32 %v1260, 0.01
        %v1373 = vmul.f32 %v1269, 0.01
        %v1374 = vmul.f32 %v1278, 0.01
        %v1375 = vmul.f32 %v1287, 0.01
        %v1376 = vmul.f32 %v1296, 0.01
        %v1377 = vmul.f32 %v1305, 0.01
        %v1378 = vmul.f32 %v1314, 0.01
        %v1379 = vmul.f32 %v1323, 0.01
        %v1380 = vmul.f32 %v1332, 0.01
        %v1381 = vmul.f32 %v1341, 0.01
        %v1382 = vmul.f32 %v1350, 0.01
        %v1383 = vmul.f32 %v1359, 0.01
        %v1384 = vmul.f32 %v1368, 0.01
        %v1385 = vsel %vm1177, %v1034, %v1369
        %v1386 = vsel %vm1178, %v1036, %v1370
        %v1387 = vsel %vm1179, %v1123, %v1371
        %v1388 = vsel %vm1180, %v1125, %v1372
        %v1389 = vsel %vm1181, %v1040, %v1373
        %v1390 = vsel %vm1182, %v1042, %v1374
        %v1391 = vsel %vm1183, %v1129, %v1375
        %v1392 = vsel %vm1184, %v1131, %v1376
        %v1393 = vsel %vm1185, %v1046, %v1377
        %v1394 = vsel %vm1186, %v1048, %v1378
        %v1395 = vsel %vm1187, %v1135, %v1379
        %v1396 = vsel %vm1188, %v1137, %v1380
        %v1397 = vsel %vm1189, %v1052, %v1381
        %v1398 = vsel %vm1190, %v1054, %v1382
        %v1399 = vsel %vm1191, %v1141, %v1383
        %v1400 = vsel %vm1192, %v1143, %v1384
        %v1401 = vld [vmem:[%s5] sm:$0xff]
        %v1402 = vld [vmem:[%s5 + $0x8] sm:$0xff]
        %v1403 = vld [vmem:[%s5 + $0x10] sm:$0xff]
        %v1404 = vld [vmem:[%s5 + $0x18] sm:$0xff]
        %v1405 = vld [vmem:[%s6] sm:$0xff]
        %v1406 = vld [vmem:[%s6 + $0x8] sm:$0xff]
        %v1407 = vld [vmem:[%s6 + $0x10] sm:$0xff]
        %v1408 = vld [vmem:[%s6 + $0x18] sm:$0xff]
        %v1409 = vld [vmem:[%s7] sm:$0xff]
        %v1410 = vld [vmem:[%s7 + $0x8] sm:$0xff]
        %v1411 = vld [vmem:[%s7 + $0x10] sm:$0xff]
        %v1412 = vld [vmem:[%s7 + $0x18] sm:$0xff]
        %v1414 = vsel %vm466, %v1405, 0
        %v1417 = vsel %vm466, %v1406, 0
        %v1420 = vsel %vm466, %v1407, 0
        %v1423 = vsel %vm466, %v1408, 0
        %1425 = vmatprep.subr.mxu0 0.0
        %1426 = vmatpush1.msra.mxu0 0.0
        %1427 = vmatprep.subr.mxu0 0.0
        %1428 = vmatpush1.msra.mxu0 0.0
        %1429 = vmatprep.subr.mxu0 0.0
        %1430 = vmatpush1.msra.mxu0 0.0
        %1431 = vmatprep.subr.mxu0 0.0
        %1432 = vmatpush1.msra.mxu0 0.0
        %1433 = vmatprep.subr.mxu0 0.0
        %1434 = vmatpush1.msra.mxu0 0.0
        %1435 = vmatprep.subr.mxu0 0.0
        %1436 = vmatpush1.msra.mxu0 0.0
        %1437 = vmatprep.subr.mxu0 0.0
        %1438 = vmatpush1.msra.mxu0 0.0
        %1439 = vmatprep.subr.mxu0 0.0
        %1440 = vmatpush1.msra.mxu0 0.0
        %1441 = vmatprep.subr.mxu0 0.0
        %1442 = vmatpush1.msra.mxu0 0.0
        %1443 = vmatprep.subr.mxu0 0.0
        %1444 = vmatpush1.msra.mxu0 0.0
        %1445 = vmatprep.subr.mxu0 0.0
        %1446 = vmatpush1.msra.mxu0 0.0
        %1447 = vmatprep.subr.mxu0 0.0
        %1448 = vmatpush1.msra.mxu0 0.0
        %1449 = vmatprep.subr.mxu0 0.0
        %1450 = vmatpush1.msra.mxu0 0.0
        %1451 = vmatprep.subr.mxu0 0.0
        %1452 = vmatpush1.msra.mxu0 0.0
        %1453 = vmatprep.subr.mxu0 0.0
        %1454 = vmatpush1.msra.mxu0 0.0
        %1455 = vmatprep.subr.mxu0 %v484
        %1456 = vmatpush1.msra.mxu0 %v481
        %1457 = vmatprep.subr.mxu0 0.0
        %1458 = vmatpush2.msra.mxu0 0.0
        %1459 = vmatprep.subr.mxu0 0.0
        %1460 = vmatpush2.msra.mxu0 0.0
        %1461 = vmatprep.subr.mxu0 0.0
        %1462 = vmatpush2.msra.mxu0 0.0
        %1463 = vmatprep.subr.mxu0 0.0
        %1464 = vmatpush2.msra.mxu0 0.0
        %1465 = vmatprep.subr.mxu0 0.0
        %1466 = vmatpush2.msra.mxu0 0.0
        %1467 = vmatprep.subr.mxu0 0.0
        %1468 = vmatpush2.msra.mxu0 0.0
        %1469 = vmatprep.subr.mxu0 0.0
        %1470 = vmatpush2.msra.mxu0 0.0
        %1471 = vmatprep.subr.mxu0 0.0
        %1472 = vmatpush2.msra.mxu0 0.0
        %1473 = vmatprep.subr.mxu0 0.0
        %1474 = vmatpush2.msra.mxu0 0.0
        %1475 = vmatprep.subr.mxu0 0.0
        %1476 = vmatpush2.msra.mxu0 0.0
        %1477 = vmatprep.subr.mxu0 0.0
        %1478 = vmatpush2.msra.mxu0 0.0
        %1479 = vmatprep.subr.mxu0 0.0
        %1480 = vmatpush2.msra.mxu0 0.0
        %1481 = vmatprep.subr.mxu0 0.0
        %1482 = vmatpush2.msra.mxu0 0.0
        %1483 = vmatprep.subr.mxu0 0.0
        %1484 = vmatpush2.msra.mxu0 0.0
        %1485 = vmatprep.subr.mxu0 0.0
        %1486 = vmatpush2.msra.mxu0 0.0
        %1487 = vmatprep.subr.mxu0 0.0
        %1488 = vmatpush2.msra.mxu0 0.0
        %1489 = vmatprep.mubr.f32.mxu0 0.0
        %1490 = vmatmul.mubr.f32.gmra.mxu0 %v1414
        %v1491 = vpop.f32.mrf.mxu0
        %v1492 = vadd.f32 0.0, %v1491
        %v1493 = vpop.f32.mrf.mxu0
        %v1494 = vadd.f32 0.0, %v1493
        %1495 = vmatprep.mubr.f32.mxu0 0.0
        %1496 = vmatmul.mubr.f32.gmra.mxu0 %v1417
        %v1497 = vpop.f32.mrf.mxu0
        %v1498 = vadd.f32 0.0, %v1497
        %v1499 = vpop.f32.mrf.mxu0
        %v1500 = vadd.f32 0.0, %v1499
        %1501 = vmatprep.mubr.f32.mxu0 0.0
        %1502 = vmatmul.mubr.f32.gmra.mxu0 %v1420
        %v1503 = vpop.f32.mrf.mxu0
        %v1504 = vadd.f32 0.0, %v1503
        %v1505 = vpop.f32.mrf.mxu0
        %v1506 = vadd.f32 0.0, %v1505
        %1507 = vmatprep.mubr.f32.mxu0 0.0
        %1508 = vmatmul.mubr.f32.gmra.mxu0 %v1423
        %v1509 = vpop.f32.mrf.mxu0
        %v1510 = vadd.f32 0.0, %v1509
        %v1511 = vpop.f32.mrf.mxu0
        %v1512 = vadd.f32 0.0, %v1511
        %1513 = vdwg.mxu0
        %1514 = vmatprep.subr.mxu0 0.0
        %1515 = vmatpush1.msra.mxu0 0.0
        %1516 = vmatprep.subr.mxu0 0.0
        %1517 = vmatpush1.msra.mxu0 0.0
        %1518 = vmatprep.subr.mxu0 0.0
        %1519 = vmatpush1.msra.mxu0 0.0
        %1520 = vmatprep.subr.mxu0 0.0
        %1521 = vmatpush1.msra.mxu0 0.0
        %1522 = vmatprep.subr.mxu0 0.0
        %1523 = vmatpush1.msra.mxu0 0.0
        %1524 = vmatprep.subr.mxu0 0.0
        %1525 = vmatpush1.msra.mxu0 0.0
        %1526 = vmatprep.subr.mxu0 0.0
        %1527 = vmatpush1.msra.mxu0 0.0
        %1528 = vmatprep.subr.mxu0 0.0
        %1529 = vmatpush1.msra.mxu0 0.0
        %1530 = vmatprep.subr.mxu0 0.0
        %1531 = vmatpush1.msra.mxu0 0.0
        %1532 = vmatprep.subr.mxu0 0.0
        %1533 = vmatpush1.msra.mxu0 0.0
        %1534 = vmatprep.subr.mxu0 0.0
        %1535 = vmatpush1.msra.mxu0 0.0
        %1536 = vmatprep.subr.mxu0 0.0
        %1537 = vmatpush1.msra.mxu0 0.0
        %1538 = vmatprep.subr.mxu0 0.0
        %1539 = vmatpush1.msra.mxu0 0.0
        %1540 = vmatprep.subr.mxu0 0.0
        %1541 = vmatpush1.msra.mxu0 0.0
        %1542 = vmatprep.subr.mxu0 0.0
        %1543 = vmatpush1.msra.mxu0 0.0
        %1544 = vmatprep.subr.mxu0 %v490
        %1545 = vmatpush1.msra.mxu0 %v487
        %1546 = vmatprep.subr.mxu0 0.0
        %1547 = vmatpush2.msra.mxu0 0.0
        %1548 = vmatprep.subr.mxu0 0.0
        %1549 = vmatpush2.msra.mxu0 0.0
        %1550 = vmatprep.subr.mxu0 0.0
        %1551 = vmatpush2.msra.mxu0 0.0
        %1552 = vmatprep.subr.mxu0 0.0
        %1553 = vmatpush2.msra.mxu0 0.0
        %1554 = vmatprep.subr.mxu0 0.0
        %1555 = vmatpush2.msra.mxu0 0.0
        %1556 = vmatprep.subr.mxu0 0.0
        %1557 = vmatpush2.msra.mxu0 0.0
        %1558 = vmatprep.subr.mxu0 0.0
        %1559 = vmatpush2.msra.mxu0 0.0
        %1560 = vmatprep.subr.mxu0 0.0
        %1561 = vmatpush2.msra.mxu0 0.0
        %1562 = vmatprep.subr.mxu0 0.0
        %1563 = vmatpush2.msra.mxu0 0.0
        %1564 = vmatprep.subr.mxu0 0.0
        %1565 = vmatpush2.msra.mxu0 0.0
        %1566 = vmatprep.subr.mxu0 0.0
        %1567 = vmatpush2.msra.mxu0 0.0
        %1568 = vmatprep.subr.mxu0 0.0
        %1569 = vmatpush2.msra.mxu0 0.0
        %1570 = vmatprep.subr.mxu0 0.0
        %1571 = vmatpush2.msra.mxu0 0.0
        %1572 = vmatprep.subr.mxu0 0.0
        %1573 = vmatpush2.msra.mxu0 0.0
        %1574 = vmatprep.subr.mxu0 0.0
        %1575 = vmatpush2.msra.mxu0 0.0
        %1576 = vmatprep.subr.mxu0 0.0
        %1577 = vmatpush2.msra.mxu0 0.0
        %1578 = vmatprep.mubr.f32.mxu0 0.0
        %1579 = vmatmul.mubr.f32.gmra.mxu0 %v1414
        %v1580 = vpop.f32.mrf.mxu0
        %v1581 = vadd.f32 0.0, %v1580
        %v1582 = vpop.f32.mrf.mxu0
        %v1583 = vadd.f32 0.0, %v1582
        %1584 = vmatprep.mubr.f32.mxu0 0.0
        %1585 = vmatmul.mubr.f32.gmra.mxu0 %v1417
        %v1586 = vpop.f32.mrf.mxu0
        %v1587 = vadd.f32 0.0, %v1586
        %v1588 = vpop.f32.mrf.mxu0
        %v1589 = vadd.f32 0.0, %v1588
        %1590 = vmatprep.mubr.f32.mxu0 0.0
        %1591 = vmatmul.mubr.f32.gmra.mxu0 %v1420
        %v1592 = vpop.f32.mrf.mxu0
        %v1593 = vadd.f32 0.0, %v1592
        %v1594 = vpop.f32.mrf.mxu0
        %v1595 = vadd.f32 0.0, %v1594
        %1596 = vmatprep.mubr.f32.mxu0 0.0
        %1597 = vmatmul.mubr.f32.gmra.mxu0 %v1423
        %v1598 = vpop.f32.mrf.mxu0
        %v1599 = vadd.f32 0.0, %v1598
        %v1600 = vpop.f32.mrf.mxu0
        %v1601 = vadd.f32 0.0, %v1600
        %1602 = vdwg.mxu0
        %vm1603 = vcmask 211968
        %v1605 = vsel %vm1603, %v1401, 0
        %v1608 = vsel %vm1603, %v1402, 0
        %v1611 = vsel %vm1603, %v1403, 0
        %v1614 = vsel %vm1603, %v1404, 0
        %vm1616 = vcmask 1041408
        %v1618 = vsel %vm1616, %v1397, 0
        %v1621 = vsel %vm1616, %v1398, 0
        %v1624 = vsel %vm1616, %v1399, 0
        %v1627 = vsel %vm1616, %v1400, 0
        %1629 = vmatprep.subr.mxu0 0.0
        %1630 = vmatpush1.msra.mxu0 0.0
        %1631 = vmatprep.subr.mxu0 0.0
        %1632 = vmatpush1.msra.mxu0 0.0
        %1633 = vmatprep.subr.mxu0 0.0
        %1634 = vmatpush1.msra.mxu0 0.0
        %1635 = vmatprep.subr.mxu0 0.0
        %1636 = vmatpush1.msra.mxu0 0.0
        %1637 = vmatprep.subr.mxu0 0.0
        %1638 = vmatpush1.msra.mxu0 0.0
        %1639 = vmatprep.subr.mxu0 0.0
        %1640 = vmatpush1.msra.mxu0 0.0
        %1641 = vmatprep.subr.mxu0 0.0
        %1642 = vmatpush1.msra.mxu0 0.0
        %1643 = vmatprep.subr.mxu0 0.0
        %1644 = vmatpush1.msra.mxu0 0.0
        %1645 = vmatprep.subr.mxu0 0.0
        %1646 = vmatpush1.msra.mxu0 0.0
        %1647 = vmatprep.subr.mxu0 0.0
        %1648 = vmatpush1.msra.mxu0 0.0
        %1649 = vmatprep.subr.mxu0 0.0
        %1650 = vmatpush1.msra.mxu0 0.0
        %1651 = vmatprep.subr.mxu0 0.0
        %1652 = vmatpush1.msra.mxu0 0.0
        %1653 = vmatprep.subr.mxu0 %v1621
        %1654 = vmatpush1.msra.mxu0 %v1618
        %1655 = vmatprep.subr.mxu0 %v1394
        %1656 = vmatpush1.msra.mxu0 %v1393
        %1657 = vmatprep.subr.mxu0 %v1390
        %1658 = vmatpush1.msra.mxu0 %v1389
        %1659 = vmatprep.subr.mxu0 %v1386
        %1660 = vmatpush1.msra.mxu0 %v1385
        %1661 = vmatprep.subr.mxu0 0.0
        %1662 = vmatpush2.msra.mxu0 0.0
        %1663 = vmatprep.subr.mxu0 0.0
        %1664 = vmatpush2.msra.mxu0 0.0
        %1665 = vmatprep.subr.mxu0 0.0
        %1666 = vmatpush2.msra.mxu0 0.0
        %1667 = vmatprep.subr.mxu0 0.0
        %1668 = vmatpush2.msra.mxu0 0.0
        %1669 = vmatprep.subr.mxu0 0.0
        %1670 = vmatpush2.msra.mxu0 0.0
        %1671 = vmatprep.subr.mxu0 0.0
        %1672 = vmatpush2.msra.mxu0 0.0
        %1673 = vmatprep.subr.mxu0 0.0
        %1674 = vmatpush2.msra.mxu0 0.0
        %1675 = vmatprep.subr.mxu0 0.0
        %1676 = vmatpush2.msra.mxu0 0.0
        %1677 = vmatprep.subr.mxu0 0.0
        %1678 = vmatpush2.msra.mxu0 0.0
        %1679 = vmatprep.subr.mxu0 0.0
        %1680 = vmatpush2.msra.mxu0 0.0
        %1681 = vmatprep.subr.mxu0 0.0
        %1682 = vmatpush2.msra.mxu0 0.0
        %1683 = vmatprep.subr.mxu0 0.0
        %1684 = vmatpush2.msra.mxu0 0.0
        %1685 = vmatprep.subr.mxu0 0.0
        %1686 = vmatpush2.msra.mxu0 0.0
        %1687 = vmatprep.subr.mxu0 0.0
        %1688 = vmatpush2.msra.mxu0 0.0
        %1689 = vmatprep.subr.mxu0 0.0
        %1690 = vmatpush2.msra.mxu0 0.0
        %1691 = vmatprep.subr.mxu0 0.0
        %1692 = vmatpush2.msra.mxu0 0.0
        %1693 = vmatprep.mubr.f32.mxu0 0.0
        %1694 = vmatmul.mubr.f32.gmra.mxu0 %v1605
        %v1695 = vpop.f32.mrf.mxu0
        %v1696 = vadd.f32 %v1492, %v1695
        %v1697 = vpop.f32.mrf.mxu0
        %v1698 = vadd.f32 %v1494, %v1697
        %1699 = vmatprep.mubr.f32.mxu0 0.0
        %1700 = vmatmul.mubr.f32.gmra.mxu0 %v1608
        %v1701 = vpop.f32.mrf.mxu0
        %v1702 = vadd.f32 %v1498, %v1701
        %v1703 = vpop.f32.mrf.mxu0
        %v1704 = vadd.f32 %v1500, %v1703
        %1705 = vmatprep.mubr.f32.mxu0 0.0
        %1706 = vmatmul.mubr.f32.gmra.mxu0 %v1611
        %v1707 = vpop.f32.mrf.mxu0
        %v1708 = vadd.f32 %v1504, %v1707
        %v1709 = vpop.f32.mrf.mxu0
        %v1710 = vadd.f32 %v1506, %v1709
        %1711 = vmatprep.mubr.f32.mxu0 0.0
        %1712 = vmatmul.mubr.f32.gmra.mxu0 %v1614
        %v1713 = vpop.f32.mrf.mxu0
        %v1714 = vadd.f32 %v1510, %v1713
        %v1715 = vpop.f32.mrf.mxu0
        %v1716 = vadd.f32 %v1512, %v1715
        %1717 = vdwg.mxu0
        %1718 = vmatprep.subr.mxu0 0.0
        %1719 = vmatpush1.msra.mxu0 0.0
        %1720 = vmatprep.subr.mxu0 0.0
        %1721 = vmatpush1.msra.mxu0 0.0
        %1722 = vmatprep.subr.mxu0 0.0
        %1723 = vmatpush1.msra.mxu0 0.0
        %1724 = vmatprep.subr.mxu0 0.0
        %1725 = vmatpush1.msra.mxu0 0.0
        %1726 = vmatprep.subr.mxu0 0.0
        %1727 = vmatpush1.msra.mxu0 0.0
        %1728 = vmatprep.subr.mxu0 0.0
        %1729 = vmatpush1.msra.mxu0 0.0
        %1730 = vmatprep.subr.mxu0 0.0
        %1731 = vmatpush1.msra.mxu0 0.0
        %1732 = vmatprep.subr.mxu0 0.0
        %1733 = vmatpush1.msra.mxu0 0.0
        %1734 = vmatprep.subr.mxu0 0.0
        %1735 = vmatpush1.msra.mxu0 0.0
        %1736 = vmatprep.subr.mxu0 0.0
        %1737 = vmatpush1.msra.mxu0 0.0
        %1738 = vmatprep.subr.mxu0 0.0
        %1739 = vmatpush1.msra.mxu0 0.0
        %1740 = vmatprep.subr.mxu0 0.0
        %1741 = vmatpush1.msra.mxu0 0.0
        %1742 = vmatprep.subr.mxu0 %v1627
        %1743 = vmatpush1.msra.mxu0 %v1624
        %1744 = vmatprep.subr.mxu0 %v1396
        %1745 = vmatpush1.msra.mxu0 %v1395
        %1746 = vmatprep.subr.mxu0 %v1392
        %1747 = vmatpush1.msra.mxu0 %v1391
        %1748 = vmatprep.subr.mxu0 %v1388
        %1749 = vmatpush1.msra.mxu0 %v1387
        %1750 = vmatprep.subr.mxu0 0.0
        %1751 = vmatpush2.msra.mxu0 0.0
        %1752 = vmatprep.subr.mxu0 0.0
        %1753 = vmatpush2.msra.mxu0 0.0
        %1754 = vmatprep.subr.mxu0 0.0
        %1755 = vmatpush2.msra.mxu0 0.0
        %1756 = vmatprep.subr.mxu0 0.0
        %1757 = vmatpush2.msra.mxu0 0.0
        %1758 = vmatprep.subr.mxu0 0.0
        %1759 = vmatpush2.msra.mxu0 0.0
        %1760 = vmatprep.subr.mxu0 0.0
        %1761 = vmatpush2.msra.mxu0 0.0
        %1762 = vmatprep.subr.mxu0 0.0
        %1763 = vmatpush2.msra.mxu0 0.0
        %1764 = vmatprep.subr.mxu0 0.0
        %1765 = vmatpush2.msra.mxu0 0.0
        %1766 = vmatprep.subr.mxu0 0.0
        %1767 = vmatpush2.msra.mxu0 0.0
        %1768 = vmatprep.subr.mxu0 0.0
        %1769 = vmatpush2.msra.mxu0 0.0
        %1770 = vmatprep.subr.mxu0 0.0
        %1771 = vmatpush2.msra.mxu0 0.0
        %1772 = vmatprep.subr.mxu0 0.0
        %1773 = vmatpush2.msra.mxu0 0.0
        %1774 = vmatprep.subr.mxu0 0.0
        %1775 = vmatpush2.msra.mxu0 0.0
        %1776 = vmatprep.subr.mxu0 0.0
        %1777 = vmatpush2.msra.mxu0 0.0
        %1778 = vmatprep.subr.mxu0 0.0
        %1779 = vmatpush2.msra.mxu0 0.0
        %1780 = vmatprep.subr.mxu0 0.0
        %1781 = vmatpush2.msra.mxu0 0.0
        %1782 = vmatprep.mubr.f32.mxu0 0.0
        %1783 = vmatmul.mubr.f32.gmra.mxu0 %v1605
        %v1784 = vpop.f32.mrf.mxu0
        %v1785 = vadd.f32 %v1581, %v1784
        %v1786 = vpop.f32.mrf.mxu0
        %v1787 = vadd.f32 %v1583, %v1786
        %1788 = vmatprep.mubr.f32.mxu0 0.0
        %1789 = vmatmul.mubr.f32.gmra.mxu0 %v1608
        %v1790 = vpop.f32.mrf.mxu0
        %v1791 = vadd.f32 %v1587, %v1790
        %v1792 = vpop.f32.mrf.mxu0
        %v1793 = vadd.f32 %v1589, %v1792
        %1794 = vmatprep.mubr.f32.mxu0 0.0
        %1795 = vmatmul.mubr.f32.gmra.mxu0 %v1611
        %v1796 = vpop.f32.mrf.mxu0
        %v1797 = vadd.f32 %v1593, %v1796
        %v1798 = vpop.f32.mrf.mxu0
        %v1799 = vadd.f32 %v1595, %v1798
        %1800 = vmatprep.mubr.f32.mxu0 0.0
        %1801 = vmatmul.mubr.f32.gmra.mxu0 %v1614
        %v1802 = vpop.f32.mrf.mxu0
        %v1803 = vadd.f32 %v1599, %v1802
        %v1804 = vpop.f32.mrf.mxu0
        %v1805 = vadd.f32 %v1601, %v1804
        %1806 = vdwg.mxu0
        %v1807 = vmul.f32 %v1696, 0.70710677
        %v1808 = vmul.f32 %v1698, 0.70710677
        %v1809 = vmul.f32 %v1785, 0.70710677
        %v1810 = vmul.f32 %v1787, 0.70710677
        %v1811 = vmul.f32 %v1702, 0.70710677
        %v1812 = vmul.f32 %v1704, 0.70710677
        %v1813 = vmul.f32 %v1791, 0.70710677
        %v1814 = vmul.f32 %v1793, 0.70710677
        %v1815 = vmul.f32 %v1708, 0.70710677
        %v1816 = vmul.f32 %v1710, 0.70710677
        %v1817 = vmul.f32 %v1797, 0.70710677
        %v1818 = vmul.f32 %v1799, 0.70710677
        %v1819 = vmul.f32 %v1714, 0.70710677
        %v1820 = vmul.f32 %v1716, 0.70710677
        %v1821 = vmul.f32 %v1803, 0.70710677
        %v1822 = vmul.f32 %v1805, 0.70710677
        %1824 = vset.pattern.permute.xlu0 0
        %1825 = vperm.xlu0 %1824, %v1409
        %v1826 = vpop.permute.xlu0 %1825
        %1829 = vset.pattern.permute.xlu0 0
        %1830 = vperm.xlu0 %1829, %v1410
        %v1831 = vpop.permute.xlu0 %1830
        %1834 = vset.pattern.permute.xlu0 0
        %1835 = vperm.xlu0 %1834, %v1411
        %v1836 = vpop.permute.xlu0 %1835
        %1839 = vset.pattern.permute.xlu0 0
        %1840 = vperm.xlu0 %1839, %v1412
        %v1841 = vpop.permute.xlu0 %1840
        %v1843 = vadd.f32 %v1807, %v1826
        %v1844 = vadd.f32 %v1808, %v1826
        %v1845 = vadd.f32 %v1809, %v1826
        %v1846 = vadd.f32 %v1810, %v1826
        %v1847 = vadd.f32 %v1811, %v1831
        %v1848 = vadd.f32 %v1812, %v1831
        %v1849 = vadd.f32 %v1813, %v1831
        %v1850 = vadd.f32 %v1814, %v1831
        %v1851 = vadd.f32 %v1815, %v1836
        %v1852 = vadd.f32 %v1816, %v1836
        %v1853 = vadd.f32 %v1817, %v1836
        %v1854 = vadd.f32 %v1818, %v1836
        %v1855 = vadd.f32 %v1819, %v1841
        %v1856 = vadd.f32 %v1820, %v1841
        %v1857 = vadd.f32 %v1821, %v1841
        %v1858 = vadd.f32 %v1822, %v1841
        %v1859 = vmul.f32 %v1843, 100.0
        %v1860 = vmul.f32 %v1844, 100.0
        %v1861 = vmul.f32 %v1845, 100.0
        %v1862 = vmul.f32 %v1846, 100.0
        %v1863 = vmul.f32 %v1847, 100.0
        %v1864 = vmul.f32 %v1848, 100.0
        %v1865 = vmul.f32 %v1849, 100.0
        %v1866 = vmul.f32 %v1850, 100.0
        %v1867 = vmul.f32 %v1851, 100.0
        %v1868 = vmul.f32 %v1852, 100.0
        %v1869 = vmul.f32 %v1853, 100.0
        %v1870 = vmul.f32 %v1854, 100.0
        %v1871 = vmul.f32 %v1855, 100.0
        %v1872 = vmul.f32 %v1856, 100.0
        %v1873 = vmul.f32 %v1857, 100.0
        %v1874 = vmul.f32 %v1858, 100.0
        %v1875 = vmin.f32 %v1859, 20.0
        %v1876 = vmin.f32 %v1860, 20.0
        %v1877 = vmin.f32 %v1861, 20.0
        %v1878 = vmin.f32 %v1862, 20.0
        %v1879 = vmin.f32 %v1863, 20.0
        %v1880 = vmin.f32 %v1864, 20.0
        %v1881 = vmin.f32 %v1865, 20.0
        %v1882 = vmin.f32 %v1866, 20.0
        %v1883 = vmin.f32 %v1867, 20.0
        %v1884 = vmin.f32 %v1868, 20.0
        %v1885 = vmin.f32 %v1869, 20.0
        %v1886 = vmin.f32 %v1870, 20.0
        %v1887 = vmin.f32 %v1871, 20.0
        %v1888 = vmin.f32 %v1872, 20.0
        %v1889 = vmin.f32 %v1873, 20.0
        %v1890 = vmin.f32 %v1874, 20.0
        %vm1891 = vcmp.gt.f32.partialorder %v1859, 20.0
        %vm1892 = vcmp.gt.f32.partialorder %v1860, 20.0
        %vm1893 = vcmp.gt.f32.partialorder %v1861, 20.0
        %vm1894 = vcmp.gt.f32.partialorder %v1862, 20.0
        %vm1895 = vcmp.gt.f32.partialorder %v1863, 20.0
        %vm1896 = vcmp.gt.f32.partialorder %v1864, 20.0
        %vm1897 = vcmp.gt.f32.partialorder %v1865, 20.0
        %vm1898 = vcmp.gt.f32.partialorder %v1866, 20.0
        %vm1899 = vcmp.gt.f32.partialorder %v1867, 20.0
        %vm1900 = vcmp.gt.f32.partialorder %v1868, 20.0
        %vm1901 = vcmp.gt.f32.partialorder %v1869, 20.0
        %vm1902 = vcmp.gt.f32.partialorder %v1870, 20.0
        %vm1903 = vcmp.gt.f32.partialorder %v1871, 20.0
        %vm1904 = vcmp.gt.f32.partialorder %v1872, 20.0
        %vm1905 = vcmp.gt.f32.partialorder %v1873, 20.0
        %vm1906 = vcmp.gt.f32.partialorder %v1874, 20.0
        %v1907 = vmul.f32 %v1875, 1.442695
        %v1908 = vpow.pop %v1907
        %v1909 = vmul.f32 %v1876, 1.442695
        %v1910 = vpow.pop %v1909
        %v1911 = vmul.f32 %v1877, 1.442695
        %v1912 = vpow.pop %v1911
        %v1913 = vmul.f32 %v1878, 1.442695
        %v1914 = vpow.pop %v1913
        %v1915 = vmul.f32 %v1879, 1.442695
        %v1916 = vpow.pop %v1915
        %v1917 = vmul.f32 %v1880, 1.442695
        %v1918 = vpow.pop %v1917
        %v1919 = vmul.f32 %v1881, 1.442695
        %v1920 = vpow.pop %v1919
        %v1921 = vmul.f32 %v1882, 1.442695
        %v1922 = vpow.pop %v1921
        %v1923 = vmul.f32 %v1883, 1.442695
        %v1924 = vpow.pop %v1923
        %v1925 = vmul.f32 %v1884, 1.442695
        %v1926 = vpow.pop %v1925
        %v1927 = vmul.f32 %v1885, 1.442695
        %v1928 = vpow.pop %v1927
        %v1929 = vmul.f32 %v1886, 1.442695
        %v1930 = vpow.pop %v1929
        %v1931 = vmul.f32 %v1887, 1.442695
        %v1932 = vpow.pop %v1931
        %v1933 = vmul.f32 %v1888, 1.442695
        %v1934 = vpow.pop %v1933
        %v1935 = vmul.f32 %v1889, 1.442695
        %v1936 = vpow.pop %v1935
        %v1937 = vmul.f32 %v1890, 1.442695
        %v1938 = vpow.pop %v1937
        %v1939 = vadd.f32 %v1908, 1.0
        %v1940 = vlog2.pop %v1939
        %v1941 = vmul.f32 %v1940, 0.6931472
        %v1942 = vmul.f32 -0.5, %v1908
        %v1943 = vadd.f32 %v1942, 1.0
        %v1944 = vmul.f32 %v1943, %v1908
        %v1945 = vand.u32 2147483647, %v1908
        %vm1946 = vcmp.lt.f32.partialorder %v1945, 0.0004427343
        %v1947 = vsel %vm1946, %v1944, %v1941
        %v1948 = vadd.f32 %v1910, 1.0
        %v1949 = vlog2.pop %v1948
        %v1950 = vmul.f32 %v1949, 0.6931472
        %v1951 = vmul.f32 -0.5, %v1910
        %v1952 = vadd.f32 %v1951, 1.0
        %v1953 = vmul.f32 %v1952, %v1910
        %v1954 = vand.u32 2147483647, %v1910
        %vm1955 = vcmp.lt.f32.partialorder %v1954, 0.0004427343
        %v1956 = vsel %vm1955, %v1953, %v1950
        %v1957 = vadd.f32 %v1912, 1.0
        %v1958 = vlog2.pop %v1957
        %v1959 = vmul.f32 %v1958, 0.6931472
        %v1960 = vmul.f32 -0.5, %v1912
        %v1961 = vadd.f32 %v1960, 1.0
        %v1962 = vmul.f32 %v1961, %v1912
        %v1963 = vand.u32 2147483647, %v1912
        %vm1964 = vcmp.lt.f32.partialorder %v1963, 0.0004427343
        %v1965 = vsel %vm1964, %v1962, %v1959
        %v1966 = vadd.f32 %v1914, 1.0
        %v1967 = vlog2.pop %v1966
        %v1968 = vmul.f32 %v1967, 0.6931472
        %v1969 = vmul.f32 -0.5, %v1914
        %v1970 = vadd.f32 %v1969, 1.0
        %v1971 = vmul.f32 %v1970, %v1914
        %v1972 = vand.u32 2147483647, %v1914
        %vm1973 = vcmp.lt.f32.partialorder %v1972, 0.0004427343
        %v1974 = vsel %vm1973, %v1971, %v1968
        %v1975 = vadd.f32 %v1916, 1.0
        %v1976 = vlog2.pop %v1975
        %v1977 = vmul.f32 %v1976, 0.6931472
        %v1978 = vmul.f32 -0.5, %v1916
        %v1979 = vadd.f32 %v1978, 1.0
        %v1980 = vmul.f32 %v1979, %v1916
        %v1981 = vand.u32 2147483647, %v1916
        %vm1982 = vcmp.lt.f32.partialorder %v1981, 0.0004427343
        %v1983 = vsel %vm1982, %v1980, %v1977
        %v1984 = vadd.f32 %v1918, 1.0
        %v1985 = vlog2.pop %v1984
        %v1986 = vmul.f32 %v1985, 0.6931472
        %v1987 = vmul.f32 -0.5, %v1918
        %v1988 = vadd.f32 %v1987, 1.0
        %v1989 = vmul.f32 %v1988, %v1918
        %v1990 = vand.u32 2147483647, %v1918
        %vm1991 = vcmp.lt.f32.partialorder %v1990, 0.0004427343
        %v1992 = vsel %vm1991, %v1989, %v1986
        %v1993 = vadd.f32 %v1920, 1.0
        %v1994 = vlog2.pop %v1993
        %v1995 = vmul.f32 %v1994, 0.6931472
        %v1996 = vmul.f32 -0.5, %v1920
        %v1997 = vadd.f32 %v1996, 1.0
        %v1998 = vmul.f32 %v1997, %v1920
        %v1999 = vand.u32 2147483647, %v1920
        %vm2000 = vcmp.lt.f32.partialorder %v1999, 0.0004427343
        %v2001 = vsel %vm2000, %v1998, %v1995
        %v2002 = vadd.f32 %v1922, 1.0
        %v2003 = vlog2.pop %v2002
        %v2004 = vmul.f32 %v2003, 0.6931472
        %v2005 = vmul.f32 -0.5, %v1922
        %v2006 = vadd.f32 %v2005, 1.0
        %v2007 = vmul.f32 %v2006, %v1922
        %v2008 = vand.u32 2147483647, %v1922
        %vm2009 = vcmp.lt.f32.partialorder %v2008, 0.0004427343
        %v2010 = vsel %vm2009, %v2007, %v2004
        %v2011 = vadd.f32 %v1924, 1.0
        %v2012 = vlog2.pop %v2011
        %v2013 = vmul.f32 %v2012, 0.6931472
        %v2014 = vmul.f32 -0.5, %v1924
        %v2015 = vadd.f32 %v2014, 1.0
        %v2016 = vmul.f32 %v2015, %v1924
        %v2017 = vand.u32 2147483647, %v1924
        %vm2018 = vcmp.lt.f32.partialorder %v2017, 0.0004427343
        %v2019 = vsel %vm2018, %v2016, %v2013
        %v2020 = vadd.f32 %v1926, 1.0
        %v2021 = vlog2.pop %v2020
        %v2022 = vmul.f32 %v2021, 0.6931472
        %v2023 = vmul.f32 -0.5, %v1926
        %v2024 = vadd.f32 %v2023, 1.0
        %v2025 = vmul.f32 %v2024, %v1926
        %v2026 = vand.u32 2147483647, %v1926
        %vm2027 = vcmp.lt.f32.partialorder %v2026, 0.0004427343
        %v2028 = vsel %vm2027, %v2025, %v2022
        %v2029 = vadd.f32 %v1928, 1.0
        %v2030 = vlog2.pop %v2029
        %v2031 = vmul.f32 %v2030, 0.6931472
        %v2032 = vmul.f32 -0.5, %v1928
        %v2033 = vadd.f32 %v2032, 1.0
        %v2034 = vmul.f32 %v2033, %v1928
        %v2035 = vand.u32 2147483647, %v1928
        %vm2036 = vcmp.lt.f32.partialorder %v2035, 0.0004427343
        %v2037 = vsel %vm2036, %v2034, %v2031
        %v2038 = vadd.f32 %v1930, 1.0
        %v2039 = vlog2.pop %v2038
        %v2040 = vmul.f32 %v2039, 0.6931472
        %v2041 = vmul.f32 -0.5, %v1930
        %v2042 = vadd.f32 %v2041, 1.0
        %v2043 = vmul.f32 %v2042, %v1930
        %v2044 = vand.u32 2147483647, %v1930
        %vm2045 = vcmp.lt.f32.partialorder %v2044, 0.0004427343
        %v2046 = vsel %vm2045, %v2043, %v2040
        %v2047 = vadd.f32 %v1932, 1.0
        %v2048 = vlog2.pop %v2047
        %v2049 = vmul.f32 %v2048, 0.6931472
        %v2050 = vmul.f32 -0.5, %v1932
        %v2051 = vadd.f32 %v2050, 1.0
        %v2052 = vmul.f32 %v2051, %v1932
        %v2053 = vand.u32 2147483647, %v1932
        %vm2054 = vcmp.lt.f32.partialorder %v2053, 0.0004427343
        %v2055 = vsel %vm2054, %v2052, %v2049
        %v2056 = vadd.f32 %v1934, 1.0
        %v2057 = vlog2.pop %v2056
        %v2058 = vmul.f32 %v2057, 0.6931472
        %v2059 = vmul.f32 -0.5, %v1934
        %v2060 = vadd.f32 %v2059, 1.0
        %v2061 = vmul.f32 %v2060, %v1934
        %v2062 = vand.u32 2147483647, %v1934
        %vm2063 = vcmp.lt.f32.partialorder %v2062, 0.0004427343
        %v2064 = vsel %vm2063, %v2061, %v2058
        %v2065 = vadd.f32 %v1936, 1.0
        %v2066 = vlog2.pop %v2065
        %v2067 = vmul.f32 %v2066, 0.6931472
        %v2068 = vmul.f32 -0.5, %v1936
        %v2069 = vadd.f32 %v2068, 1.0
        %v2070 = vmul.f32 %v2069, %v1936
        %v2071 = vand.u32 2147483647, %v1936
        %vm2072 = vcmp.lt.f32.partialorder %v2071, 0.0004427343
        %v2073 = vsel %vm2072, %v2070, %v2067
        %v2074 = vadd.f32 %v1938, 1.0
        %v2075 = vlog2.pop %v2074
        %v2076 = vmul.f32 %v2075, 0.6931472
        %v2077 = vmul.f32 -0.5, %v1938
        %v2078 = vadd.f32 %v2077, 1.0
        %v2079 = vmul.f32 %v2078, %v1938
        %v2080 = vand.u32 2147483647, %v1938
        %vm2081 = vcmp.lt.f32.partialorder %v2080, 0.0004427343
        %v2082 = vsel %vm2081, %v2079, %v2076
        %v2083 = vmul.f32 %v1947, 0.01
        %v2084 = vmul.f32 %v1956, 0.01
        %v2085 = vmul.f32 %v1965, 0.01
        %v2086 = vmul.f32 %v1974, 0.01
        %v2087 = vmul.f32 %v1983, 0.01
        %v2088 = vmul.f32 %v1992, 0.01
        %v2089 = vmul.f32 %v2001, 0.01
        %v2090 = vmul.f32 %v2010, 0.01
        %v2091 = vmul.f32 %v2019, 0.01
        %v2092 = vmul.f32 %v2028, 0.01
        %v2093 = vmul.f32 %v2037, 0.01
        %v2094 = vmul.f32 %v2046, 0.01
        %v2095 = vmul.f32 %v2055, 0.01
        %v2096 = vmul.f32 %v2064, 0.01
        %v2097 = vmul.f32 %v2073, 0.01
        %v2098 = vmul.f32 %v2082, 0.01
        %v2099 = vsel %vm1891, %v1843, %v2083
        %v2100 = vsel %vm1892, %v1844, %v2084
        %v2101 = vsel %vm1893, %v1845, %v2085
        %v2102 = vsel %vm1894, %v1846, %v2086
        %v2103 = vsel %vm1895, %v1847, %v2087
        %v2104 = vsel %vm1896, %v1848, %v2088
        %v2105 = vsel %vm1897, %v1849, %v2089
        %v2106 = vsel %vm1898, %v1850, %v2090
        %v2107 = vsel %vm1899, %v1851, %v2091
        %v2108 = vsel %vm1900, %v1852, %v2092
        %v2109 = vsel %vm1901, %v1853, %v2093
        %v2110 = vsel %vm1902, %v1854, %v2094
        %v2111 = vsel %vm1903, %v1855, %v2095
        %v2112 = vsel %vm1904, %v1856, %v2096
        %v2113 = vsel %vm1905, %v1857, %v2097
        %v2114 = vsel %vm1906, %v1858, %v2098
        %v2115 = vld [vmem:[%s8] sm:$0xff]
        %v2116 = vld [vmem:[%s8 + $0x8] sm:$0xff]
        %v2117 = vld [vmem:[%s8 + $0x10] sm:$0xff]
        %v2118 = vld [vmem:[%s8 + $0x18] sm:$0xff]
        %v2119 = vld [vmem:[%s9] sm:$0xff]
        %v2120 = vld [vmem:[%s9 + $0x8] sm:$0xff]
        %v2121 = vld [vmem:[%s9 + $0x10] sm:$0xff]
        %v2122 = vld [vmem:[%s9 + $0x18] sm:$0xff]
        %2124 = vset.pattern.permute.xlu0 0
        %2125 = vperm.xlu0 %2124, %v2119
        %v2126 = vpop.permute.xlu0 %2125
        %2129 = vset.pattern.permute.xlu0 0
        %2130 = vperm.xlu0 %2129, %v2120
        %v2131 = vpop.permute.xlu0 %2130
        %2134 = vset.pattern.permute.xlu0 0
        %2135 = vperm.xlu0 %2134, %v2121
        %v2136 = vpop.permute.xlu0 %2135
        %2139 = vset.pattern.permute.xlu0 0
        %2140 = vperm.xlu0 %2139, %v2122
        %v2141 = vpop.permute.xlu0 %2140
        %v2144 = vsel %vm954, %v2115, 0
        %v2147 = vsel %vm954, %v2116, 0
        %v2150 = vsel %vm954, %v2117, 0
        %v2153 = vsel %vm954, %v2118, 0
        %2155 = vmatprep.subr.mxu0 0.0
        %2156 = vmatpush1.msra.mxu0 0.0
        %2157 = vmatprep.subr.mxu0 0.0
        %2158 = vmatpush1.msra.mxu0 0.0
        %2159 = vmatprep.subr.mxu0 0.0
        %2160 = vmatpush1.msra.mxu0 0.0
        %2161 = vmatprep.subr.mxu0 0.0
        %2162 = vmatpush1.msra.mxu0 0.0
        %2163 = vmatprep.subr.mxu0 0.0
        %2164 = vmatpush1.msra.mxu0 0.0
        %2165 = vmatprep.subr.mxu0 0.0
        %2166 = vmatpush1.msra.mxu0 0.0
        %2167 = vmatprep.subr.mxu0 0.0
        %2168 = vmatpush1.msra.mxu0 0.0
        %2169 = vmatprep.subr.mxu0 0.0
        %2170 = vmatpush1.msra.mxu0 0.0
        %2171 = vmatprep.subr.mxu0 0.0
        %2172 = vmatpush1.msra.mxu0 0.0
        %2173 = vmatprep.subr.mxu0 0.0
        %2174 = vmatpush1.msra.mxu0 0.0
        %2175 = vmatprep.subr.mxu0 0.0
        %2176 = vmatpush1.msra.mxu0 0.0
        %2177 = vmatprep.subr.mxu0 0.0
        %2178 = vmatpush1.msra.mxu0 0.0
        %2179 = vmatprep.subr.mxu0 %v2112
        %2180 = vmatpush1.msra.mxu0 %v2111
        %2181 = vmatprep.subr.mxu0 %v2108
        %2182 = vmatpush1.msra.mxu0 %v2107
        %2183 = vmatprep.subr.mxu0 %v2104
        %2184 = vmatpush1.msra.mxu0 %v2103
        %2185 = vmatprep.subr.mxu0 %v2100
        %2186 = vmatpush1.msra.mxu0 %v2099
        %2187 = vmatprep.subr.mxu0 0.0
        %2188 = vmatpush2.msra.mxu0 0.0
        %2189 = vmatprep.subr.mxu0 0.0
        %2190 = vmatpush2.msra.mxu0 0.0
        %2191 = vmatprep.subr.mxu0 0.0
        %2192 = vmatpush2.msra.mxu0 0.0
        %2193 = vmatprep.subr.mxu0 0.0
        %2194 = vmatpush2.msra.mxu0 0.0
        %2195 = vmatprep.subr.mxu0 0.0
        %2196 = vmatpush2.msra.mxu0 0.0
        %2197 = vmatprep.subr.mxu0 0.0
        %2198 = vmatpush2.msra.mxu0 0.0
        %2199 = vmatprep.subr.mxu0 0.0
        %2200 = vmatpush2.msra.mxu0 0.0
        %2201 = vmatprep.subr.mxu0 0.0
        %2202 = vmatpush2.msra.mxu0 0.0
        %2203 = vmatprep.subr.mxu0 0.0
        %2204 = vmatpush2.msra.mxu0 0.0
        %2205 = vmatprep.subr.mxu0 0.0
        %2206 = vmatpush2.msra.mxu0 0.0
        %2207 = vmatprep.subr.mxu0 0.0
        %2208 = vmatpush2.msra.mxu0 0.0
        %2209 = vmatprep.subr.mxu0 0.0
        %2210 = vmatpush2.msra.mxu0 0.0
        %2211 = vmatprep.subr.mxu0 0.0
        %2212 = vmatpush2.msra.mxu0 0.0
        %2213 = vmatprep.subr.mxu0 0.0
        %2214 = vmatpush2.msra.mxu0 0.0
        %2215 = vmatprep.subr.mxu0 0.0
        %2216 = vmatpush2.msra.mxu0 0.0
        %2217 = vmatprep.subr.mxu0 0.0
        %2218 = vmatpush2.msra.mxu0 0.0
        %2219 = vmatprep.mubr.f32.mxu0 0.0
        %2220 = vmatmul.mubr.f32.gmra.mxu0 %v2144
        %v2221 = vpop.f32.mrf.mxu0
        %v2222 = vadd.f32 %v2126, %v2221
        %v2223 = vpop.f32.mrf.mxu0
        %v2224 = vadd.f32 %v2126, %v2223
        %2225 = vmatprep.mubr.f32.mxu0 0.0
        %2226 = vmatmul.mubr.f32.gmra.mxu0 %v2147
        %v2227 = vpop.f32.mrf.mxu0
        %v2228 = vadd.f32 %v2131, %v2227
        %v2229 = vpop.f32.mrf.mxu0
        %v2230 = vadd.f32 %v2131, %v2229
        %2231 = vmatprep.mubr.f32.mxu0 0.0
        %2232 = vmatmul.mubr.f32.gmra.mxu0 %v2150
        %v2233 = vpop.f32.mrf.mxu0
        %v2234 = vadd.f32 %v2136, %v2233
        %v2235 = vpop.f32.mrf.mxu0
        %v2236 = vadd.f32 %v2136, %v2235
        %2237 = vmatprep.mubr.f32.mxu0 0.0
        %2238 = vmatmul.mubr.f32.gmra.mxu0 %v2153
        %v2239 = vpop.f32.mrf.mxu0
        %v2240 = vadd.f32 %v2141, %v2239
        %v2241 = vpop.f32.mrf.mxu0
        %v2242 = vadd.f32 %v2141, %v2241
        %2243 = vdwg.mxu0
        %2244 = vmatprep.subr.mxu0 0.0
        %2245 = vmatpush1.msra.mxu0 0.0
        %2246 = vmatprep.subr.mxu0 0.0
        %2247 = vmatpush1.msra.mxu0 0.0
        %2248 = vmatprep.subr.mxu0 0.0
        %2249 = vmatpush1.msra.mxu0 0.0
        %2250 = vmatprep.subr.mxu0 0.0
        %2251 = vmatpush1.msra.mxu0 0.0
        %2252 = vmatprep.subr.mxu0 0.0
        %2253 = vmatpush1.msra.mxu0 0.0
        %2254 = vmatprep.subr.mxu0 0.0
        %2255 = vmatpush1.msra.mxu0 0.0
        %2256 = vmatprep.subr.mxu0 0.0
        %2257 = vmatpush1.msra.mxu0 0.0
        %2258 = vmatprep.subr.mxu0 0.0
        %2259 = vmatpush1.msra.mxu0 0.0
        %2260 = vmatprep.subr.mxu0 0.0
        %2261 = vmatpush1.msra.mxu0 0.0
        %2262 = vmatprep.subr.mxu0 0.0
        %2263 = vmatpush1.msra.mxu0 0.0
        %2264 = vmatprep.subr.mxu0 0.0
        %2265 = vmatpush1.msra.mxu0 0.0
        %2266 = vmatprep.subr.mxu0 0.0
        %2267 = vmatpush1.msra.mxu0 0.0
        %2268 = vmatprep.subr.mxu0 %v2114
        %2269 = vmatpush1.msra.mxu0 %v2113
        %2270 = vmatprep.subr.mxu0 %v2110
        %2271 = vmatpush1.msra.mxu0 %v2109
        %2272 = vmatprep.subr.mxu0 %v2106
        %2273 = vmatpush1.msra.mxu0 %v2105
        %2274 = vmatprep.subr.mxu0 %v2102
        %2275 = vmatpush1.msra.mxu0 %v2101
        %2276 = vmatprep.subr.mxu0 0.0
        %2277 = vmatpush2.msra.mxu0 0.0
        %2278 = vmatprep.subr.mxu0 0.0
        %2279 = vmatpush2.msra.mxu0 0.0
        %2280 = vmatprep.subr.mxu0 0.0
        %2281 = vmatpush2.msra.mxu0 0.0
        %2282 = vmatprep.subr.mxu0 0.0
        %2283 = vmatpush2.msra.mxu0 0.0
        %2284 = vmatprep.subr.mxu0 0.0
        %2285 = vmatpush2.msra.mxu0 0.0
        %2286 = vmatprep.subr.mxu0 0.0
        %2287 = vmatpush2.msra.mxu0 0.0
        %2288 = vmatprep.subr.mxu0 0.0
        %2289 = vmatpush2.msra.mxu0 0.0
        %2290 = vmatprep.subr.mxu0 0.0
        %2291 = vmatpush2.msra.mxu0 0.0
        %2292 = vmatprep.subr.mxu0 0.0
        %2293 = vmatpush2.msra.mxu0 0.0
        %2294 = vmatprep.subr.mxu0 0.0
        %2295 = vmatpush2.msra.mxu0 0.0
        %2296 = vmatprep.subr.mxu0 0.0
        %2297 = vmatpush2.msra.mxu0 0.0
        %2298 = vmatprep.subr.mxu0 0.0
        %2299 = vmatpush2.msra.mxu0 0.0
        %2300 = vmatprep.subr.mxu0 0.0
        %2301 = vmatpush2.msra.mxu0 0.0
        %2302 = vmatprep.subr.mxu0 0.0
        %2303 = vmatpush2.msra.mxu0 0.0
        %2304 = vmatprep.subr.mxu0 0.0
        %2305 = vmatpush2.msra.mxu0 0.0
        %2306 = vmatprep.subr.mxu0 0.0
        %2307 = vmatpush2.msra.mxu0 0.0
        %2308 = vmatprep.mubr.f32.mxu0 0.0
        %2309 = vmatmul.mubr.f32.gmra.mxu0 %v2144
        %v2310 = vpop.f32.mrf.mxu0
        %v2311 = vadd.f32 %v2126, %v2310
        %v2312 = vpop.f32.mrf.mxu0
        %v2313 = vadd.f32 %v2126, %v2312
        %2314 = vmatprep.mubr.f32.mxu0 0.0
        %2315 = vmatmul.mubr.f32.gmra.mxu0 %v2147
        %v2316 = vpop.f32.mrf.mxu0
        %v2317 = vadd.f32 %v2131, %v2316
        %v2318 = vpop.f32.mrf.mxu0
        %v2319 = vadd.f32 %v2131, %v2318
        %2320 = vmatprep.mubr.f32.mxu0 0.0
        %2321 = vmatmul.mubr.f32.gmra.mxu0 %v2150
        %v2322 = vpop.f32.mrf.mxu0
        %v2323 = vadd.f32 %v2136, %v2322
        %v2324 = vpop.f32.mrf.mxu0
        %v2325 = vadd.f32 %v2136, %v2324
        %2326 = vmatprep.mubr.f32.mxu0 0.0
        %2327 = vmatmul.mubr.f32.gmra.mxu0 %v2153
        %v2328 = vpop.f32.mrf.mxu0
        %v2329 = vadd.f32 %v2141, %v2328
        %v2330 = vpop.f32.mrf.mxu0
        %v2331 = vadd.f32 %v2141, %v2330
        %2332 = vdwg.mxu0
        %v2333 = vmul.f32 %v2222, 100.0
        %v2334 = vmul.f32 %v2224, 100.0
        %v2335 = vmul.f32 %v2311, 100.0
        %v2336 = vmul.f32 %v2313, 100.0
        %v2337 = vmul.f32 %v2228, 100.0
        %v2338 = vmul.f32 %v2230, 100.0
        %v2339 = vmul.f32 %v2317, 100.0
        %v2340 = vmul.f32 %v2319, 100.0
        %v2341 = vmul.f32 %v2234, 100.0
        %v2342 = vmul.f32 %v2236, 100.0
        %v2343 = vmul.f32 %v2323, 100.0
        %v2344 = vmul.f32 %v2325, 100.0
        %v2345 = vmul.f32 %v2240, 100.0
        %v2346 = vmul.f32 %v2242, 100.0
        %v2347 = vmul.f32 %v2329, 100.0
        %v2348 = vmul.f32 %v2331, 100.0
        %v2349 = vmin.f32 %v2333, 20.0
        %v2350 = vmin.f32 %v2334, 20.0
        %v2351 = vmin.f32 %v2335, 20.0
        %v2352 = vmin.f32 %v2336, 20.0
        %v2353 = vmin.f32 %v2337, 20.0
        %v2354 = vmin.f32 %v2338, 20.0
        %v2355 = vmin.f32 %v2339, 20.0
        %v2356 = vmin.f32 %v2340, 20.0
        %v2357 = vmin.f32 %v2341, 20.0
        %v2358 = vmin.f32 %v2342, 20.0
        %v2359 = vmin.f32 %v2343, 20.0
        %v2360 = vmin.f32 %v2344, 20.0
        %v2361 = vmin.f32 %v2345, 20.0
        %v2362 = vmin.f32 %v2346, 20.0
        %v2363 = vmin.f32 %v2347, 20.0
        %v2364 = vmin.f32 %v2348, 20.0
        %vm2365 = vcmp.gt.f32.partialorder %v2333, 20.0
        %vm2366 = vcmp.gt.f32.partialorder %v2334, 20.0
        %vm2367 = vcmp.gt.f32.partialorder %v2335, 20.0
        %vm2368 = vcmp.gt.f32.partialorder %v2336, 20.0
        %vm2369 = vcmp.gt.f32.partialorder %v2337, 20.0
        %vm2370 = vcmp.gt.f32.partialorder %v2338, 20.0
        %vm2371 = vcmp.gt.f32.partialorder %v2339, 20.0
        %vm2372 = vcmp.gt.f32.partialorder %v2340, 20.0
        %vm2373 = vcmp.gt.f32.partialorder %v2341, 20.0
        %vm2374 = vcmp.gt.f32.partialorder %v2342, 20.0
        %vm2375 = vcmp.gt.f32.partialorder %v2343, 20.0
        %vm2376 = vcmp.gt.f32.partialorder %v2344, 20.0
        %vm2377 = vcmp.gt.f32.partialorder %v2345, 20.0
        %vm2378 = vcmp.gt.f32.partialorder %v2346, 20.0
        %vm2379 = vcmp.gt.f32.partialorder %v2347, 20.0
        %vm2380 = vcmp.gt.f32.partialorder %v2348, 20.0
        %v2381 = vmul.f32 %v2349, 1.442695
        %v2382 = vpow.pop %v2381
        %v2383 = vmul.f32 %v2350, 1.442695
        %v2384 = vpow.pop %v2383
        %v2385 = vmul.f32 %v2351, 1.442695
        %v2386 = vpow.pop %v2385
        %v2387 = vmul.f32 %v2352, 1.442695
        %v2388 = vpow.pop %v2387
        %v2389 = vmul.f32 %v2353, 1.442695
        %v2390 = vpow.pop %v2389
        %v2391 = vmul.f32 %v2354, 1.442695
        %v2392 = vpow.pop %v2391
        %v2393 = vmul.f32 %v2355, 1.442695
        %v2394 = vpow.pop %v2393
        %v2395 = vmul.f32 %v2356, 1.442695
        %v2396 = vpow.pop %v2395
        %v2397 = vmul.f32 %v2357, 1.442695
        %v2398 = vpow.pop %v2397
        %v2399 = vmul.f32 %v2358, 1.442695
        %v2400 = vpow.pop %v2399
        %v2401 = vmul.f32 %v2359, 1.442695
        %v2402 = vpow.pop %v2401
        %v2403 = vmul.f32 %v2360, 1.442695
        %v2404 = vpow.pop %v2403
        %v2405 = vmul.f32 %v2361, 1.442695
        %v2406 = vpow.pop %v2405
        %v2407 = vmul.f32 %v2362, 1.442695
        %v2408 = vpow.pop %v2407
        %v2409 = vmul.f32 %v2363, 1.442695
        %v2410 = vpow.pop %v2409
        %v2411 = vmul.f32 %v2364, 1.442695
        %v2412 = vpow.pop %v2411
        %v2413 = vadd.f32 %v2382, 1.0
        %v2414 = vlog2.pop %v2413
        %v2415 = vmul.f32 %v2414, 0.6931472
        %v2416 = vmul.f32 -0.5, %v2382
        %v2417 = vadd.f32 %v2416, 1.0
        %v2418 = vmul.f32 %v2417, %v2382
        %v2419 = vand.u32 2147483647, %v2382
        %vm2420 = vcmp.lt.f32.partialorder %v2419, 0.0004427343
        %v2421 = vsel %vm2420, %v2418, %v2415
        %v2422 = vadd.f32 %v2384, 1.0
        %v2423 = vlog2.pop %v2422
        %v2424 = vmul.f32 %v2423, 0.6931472
        %v2425 = vmul.f32 -0.5, %v2384
        %v2426 = vadd.f32 %v2425, 1.0
        %v2427 = vmul.f32 %v2426, %v2384
        %v2428 = vand.u32 2147483647, %v2384
        %vm2429 = vcmp.lt.f32.partialorder %v2428, 0.0004427343
        %v2430 = vsel %vm2429, %v2427, %v2424
        %v2431 = vadd.f32 %v2386, 1.0
        %v2432 = vlog2.pop %v2431
        %v2433 = vmul.f32 %v2432, 0.6931472
        %v2434 = vmul.f32 -0.5, %v2386
        %v2435 = vadd.f32 %v2434, 1.0
        %v2436 = vmul.f32 %v2435, %v2386
        %v2437 = vand.u32 2147483647, %v2386
        %vm2438 = vcmp.lt.f32.partialorder %v2437, 0.0004427343
        %v2439 = vsel %vm2438, %v2436, %v2433
        %v2440 = vadd.f32 %v2388, 1.0
        %v2441 = vlog2.pop %v2440
        %v2442 = vmul.f32 %v2441, 0.6931472
        %v2443 = vmul.f32 -0.5, %v2388
        %v2444 = vadd.f32 %v2443, 1.0
        %v2445 = vmul.f32 %v2444, %v2388
        %v2446 = vand.u32 2147483647, %v2388
        %vm2447 = vcmp.lt.f32.partialorder %v2446, 0.0004427343
        %v2448 = vsel %vm2447, %v2445, %v2442
        %v2449 = vadd.f32 %v2390, 1.0
        %v2450 = vlog2.pop %v2449
        %v2451 = vmul.f32 %v2450, 0.6931472
        %v2452 = vmul.f32 -0.5, %v2390
        %v2453 = vadd.f32 %v2452, 1.0
        %v2454 = vmul.f32 %v2453, %v2390
        %v2455 = vand.u32 2147483647, %v2390
        %vm2456 = vcmp.lt.f32.partialorder %v2455, 0.0004427343
        %v2457 = vsel %vm2456, %v2454, %v2451
        %v2458 = vadd.f32 %v2392, 1.0
        %v2459 = vlog2.pop %v2458
        %v2460 = vmul.f32 %v2459, 0.6931472
        %v2461 = vmul.f32 -0.5, %v2392
        %v2462 = vadd.f32 %v2461, 1.0
        %v2463 = vmul.f32 %v2462, %v2392
        %v2464 = vand.u32 2147483647, %v2392
        %vm2465 = vcmp.lt.f32.partialorder %v2464, 0.0004427343
        %v2466 = vsel %vm2465, %v2463, %v2460
        %v2467 = vadd.f32 %v2394, 1.0
        %v2468 = vlog2.pop %v2467
        %v2469 = vmul.f32 %v2468, 0.6931472
        %v2470 = vmul.f32 -0.5, %v2394
        %v2471 = vadd.f32 %v2470, 1.0
        %v2472 = vmul.f32 %v2471, %v2394
        %v2473 = vand.u32 2147483647, %v2394
        %vm2474 = vcmp.lt.f32.partialorder %v2473, 0.0004427343
        %v2475 = vsel %vm2474, %v2472, %v2469
        %v2476 = vadd.f32 %v2396, 1.0
        %v2477 = vlog2.pop %v2476
        %v2478 = vmul.f32 %v2477, 0.6931472
        %v2479 = vmul.f32 -0.5, %v2396
        %v2480 = vadd.f32 %v2479, 1.0
        %v2481 = vmul.f32 %v2480, %v2396
        %v2482 = vand.u32 2147483647, %v2396
        %vm2483 = vcmp.lt.f32.partialorder %v2482, 0.0004427343
        %v2484 = vsel %vm2483, %v2481, %v2478
        %v2485 = vadd.f32 %v2398, 1.0
        %v2486 = vlog2.pop %v2485
        %v2487 = vmul.f32 %v2486, 0.6931472
        %v2488 = vmul.f32 -0.5, %v2398
        %v2489 = vadd.f32 %v2488, 1.0
        %v2490 = vmul.f32 %v2489, %v2398
        %v2491 = vand.u32 2147483647, %v2398
        %vm2492 = vcmp.lt.f32.partialorder %v2491, 0.0004427343
        %v2493 = vsel %vm2492, %v2490, %v2487
        %v2494 = vadd.f32 %v2400, 1.0
        %v2495 = vlog2.pop %v2494
        %v2496 = vmul.f32 %v2495, 0.6931472
        %v2497 = vmul.f32 -0.5, %v2400
        %v2498 = vadd.f32 %v2497, 1.0
        %v2499 = vmul.f32 %v2498, %v2400
        %v2500 = vand.u32 2147483647, %v2400
        %vm2501 = vcmp.lt.f32.partialorder %v2500, 0.0004427343
        %v2502 = vsel %vm2501, %v2499, %v2496
        %v2503 = vadd.f32 %v2402, 1.0
        %v2504 = vlog2.pop %v2503
        %v2505 = vmul.f32 %v2504, 0.6931472
        %v2506 = vmul.f32 -0.5, %v2402
        %v2507 = vadd.f32 %v2506, 1.0
        %v2508 = vmul.f32 %v2507, %v2402
        %v2509 = vand.u32 2147483647, %v2402
        %vm2510 = vcmp.lt.f32.partialorder %v2509, 0.0004427343
        %v2511 = vsel %vm2510, %v2508, %v2505
        %v2512 = vadd.f32 %v2404, 1.0
        %v2513 = vlog2.pop %v2512
        %v2514 = vmul.f32 %v2513, 0.6931472
        %v2515 = vmul.f32 -0.5, %v2404
        %v2516 = vadd.f32 %v2515, 1.0
        %v2517 = vmul.f32 %v2516, %v2404
        %v2518 = vand.u32 2147483647, %v2404
        %vm2519 = vcmp.lt.f32.partialorder %v2518, 0.0004427343
        %v2520 = vsel %vm2519, %v2517, %v2514
        %v2521 = vadd.f32 %v2406, 1.0
        %v2522 = vlog2.pop %v2521
        %v2523 = vmul.f32 %v2522, 0.6931472
        %v2524 = vmul.f32 -0.5, %v2406
        %v2525 = vadd.f32 %v2524, 1.0
        %v2526 = vmul.f32 %v2525, %v2406
        %v2527 = vand.u32 2147483647, %v2406
        %vm2528 = vcmp.lt.f32.partialorder %v2527, 0.0004427343
        %v2529 = vsel %vm2528, %v2526, %v2523
        %v2530 = vadd.f32 %v2408, 1.0
        %v2531 = vlog2.pop %v2530
        %v2532 = vmul.f32 %v2531, 0.6931472
        %v2533 = vmul.f32 -0.5, %v2408
        %v2534 = vadd.f32 %v2533, 1.0
        %v2535 = vmul.f32 %v2534, %v2408
        %v2536 = vand.u32 2147483647, %v2408
        %vm2537 = vcmp.lt.f32.partialorder %v2536, 0.0004427343
        %v2538 = vsel %vm2537, %v2535, %v2532
        %v2539 = vadd.f32 %v2410, 1.0
        %v2540 = vlog2.pop %v2539
        %v2541 = vmul.f32 %v2540, 0.6931472
        %v2542 = vmul.f32 -0.5, %v2410
        %v2543 = vadd.f32 %v2542, 1.0
        %v2544 = vmul.f32 %v2543, %v2410
        %v2545 = vand.u32 2147483647, %v2410
        %vm2546 = vcmp.lt.f32.partialorder %v2545, 0.0004427343
        %v2547 = vsel %vm2546, %v2544, %v2541
        %v2548 = vadd.f32 %v2412, 1.0
        %v2549 = vlog2.pop %v2548
        %v2550 = vmul.f32 %v2549, 0.6931472
        %v2551 = vmul.f32 -0.5, %v2412
        %v2552 = vadd.f32 %v2551, 1.0
        %v2553 = vmul.f32 %v2552, %v2412
        %v2554 = vand.u32 2147483647, %v2412
        %vm2555 = vcmp.lt.f32.partialorder %v2554, 0.0004427343
        %v2556 = vsel %vm2555, %v2553, %v2550
        %v2557 = vmul.f32 %v2421, 0.01
        %v2558 = vmul.f32 %v2430, 0.01
        %v2559 = vmul.f32 %v2439, 0.01
        %v2560 = vmul.f32 %v2448, 0.01
        %v2561 = vmul.f32 %v2457, 0.01
        %v2562 = vmul.f32 %v2466, 0.01
        %v2563 = vmul.f32 %v2475, 0.01
        %v2564 = vmul.f32 %v2484, 0.01
        %v2565 = vmul.f32 %v2493, 0.01
        %v2566 = vmul.f32 %v2502, 0.01
        %v2567 = vmul.f32 %v2511, 0.01
        %v2568 = vmul.f32 %v2520, 0.01
        %v2569 = vmul.f32 %v2529, 0.01
        %v2570 = vmul.f32 %v2538, 0.01
        %v2571 = vmul.f32 %v2547, 0.01
        %v2572 = vmul.f32 %v2556, 0.01
        %v2573 = vsel %vm2365, %v2222, %v2557
        %v2574 = vsel %vm2366, %v2224, %v2558
        %v2575 = vsel %vm2367, %v2311, %v2559
        %v2576 = vsel %vm2368, %v2313, %v2560
        %v2577 = vsel %vm2369, %v2228, %v2561
        %v2578 = vsel %vm2370, %v2230, %v2562
        %v2579 = vsel %vm2371, %v2317, %v2563
        %v2580 = vsel %vm2372, %v2319, %v2564
        %v2581 = vsel %vm2373, %v2234, %v2565
        %v2582 = vsel %vm2374, %v2236, %v2566
        %v2583 = vsel %vm2375, %v2323, %v2567
        %v2584 = vsel %vm2376, %v2325, %v2568
        %v2585 = vsel %vm2377, %v2240, %v2569
        %v2586 = vsel %vm2378, %v2242, %v2570
        %v2587 = vsel %vm2379, %v2329, %v2571
        %v2588 = vsel %vm2380, %v2331, %v2572
        %v2589 = vld [vmem:[%s10] sm:$0x1]
        %v2590 = vld [vmem:[#allocation2] sm:$0x1]
        %2592 = vset.pattern.permute.xlu0 0
        %2593 = vperm.xlu0 %2592, %v2590
        %v2594 = vpop.permute.xlu0 %2593
        %v2596 = vlaneseq
        %v2597 = vshrl.u32 %v2596, 7
        %v2598 = vsub.s32 0, %v2597
        %v2599 = vrot.slane %v2594, %v2598
        %v2601 = vsel %vm954, %v2589, 0
        %2603 = vmatprep.subr.mxu0 0.0
        %2604 = vmatpush1.msra.mxu0 0.0
        %2605 = vmatprep.subr.mxu0 0.0
        %2606 = vmatpush1.msra.mxu0 0.0
        %2607 = vmatprep.subr.mxu0 0.0
        %2608 = vmatpush1.msra.mxu0 0.0
        %2609 = vmatprep.subr.mxu0 0.0
        %2610 = vmatpush1.msra.mxu0 0.0
        %2611 = vmatprep.subr.mxu0 0.0
        %2612 = vmatpush1.msra.mxu0 0.0
        %2613 = vmatprep.subr.mxu0 0.0
        %2614 = vmatpush1.msra.mxu0 0.0
        %2615 = vmatprep.subr.mxu0 0.0
        %2616 = vmatpush1.msra.mxu0 0.0
        %2617 = vmatprep.subr.mxu0 0.0
        %2618 = vmatpush1.msra.mxu0 0.0
        %2619 = vmatprep.subr.mxu0 0.0
        %2620 = vmatpush1.msra.mxu0 0.0
        %2621 = vmatprep.subr.mxu0 0.0
        %2622 = vmatpush1.msra.mxu0 0.0
        %2623 = vmatprep.subr.mxu0 0.0
        %2624 = vmatpush1.msra.mxu0 0.0
        %2625 = vmatprep.subr.mxu0 0.0
        %2626 = vmatpush1.msra.mxu0 0.0
        %2627 = vmatprep.subr.mxu0 %v2586
        %2628 = vmatpush1.msra.mxu0 %v2585
        %2629 = vmatprep.subr.mxu0 %v2582
        %2630 = vmatpush1.msra.mxu0 %v2581
        %2631 = vmatprep.subr.mxu0 %v2578
        %2632 = vmatpush1.msra.mxu0 %v2577
        %2633 = vmatprep.subr.mxu0 %v2574
        %2634 = vmatpush1.msra.mxu0 %v2573
        %2635 = vmatprep.subr.mxu0 0.0
        %2636 = vmatpush2.msra.mxu0 0.0
        %2637 = vmatprep.subr.mxu0 0.0
        %2638 = vmatpush2.msra.mxu0 0.0
        %2639 = vmatprep.subr.mxu0 0.0
        %2640 = vmatpush2.msra.mxu0 0.0
        %2641 = vmatprep.subr.mxu0 0.0
        %2642 = vmatpush2.msra.mxu0 0.0
        %2643 = vmatprep.subr.mxu0 0.0
        %2644 = vmatpush2.msra.mxu0 0.0
        %2645 = vmatprep.subr.mxu0 0.0
        %2646 = vmatpush2.msra.mxu0 0.0
        %2647 = vmatprep.subr.mxu0 0.0
        %2648 = vmatpush2.msra.mxu0 0.0
        %2649 = vmatprep.subr.mxu0 0.0
        %2650 = vmatpush2.msra.mxu0 0.0
        %2651 = vmatprep.subr.mxu0 0.0
        %2652 = vmatpush2.msra.mxu0 0.0
        %2653 = vmatprep.subr.mxu0 0.0
        %2654 = vmatpush2.msra.mxu0 0.0
        %2655 = vmatprep.subr.mxu0 0.0
        %2656 = vmatpush2.msra.mxu0 0.0
        %2657 = vmatprep.subr.mxu0 0.0
        %2658 = vmatpush2.msra.mxu0 0.0
        %2659 = vmatprep.subr.mxu0 0.0
        %2660 = vmatpush2.msra.mxu0 0.0
        %2661 = vmatprep.subr.mxu0 0.0
        %2662 = vmatpush2.msra.mxu0 0.0
        %2663 = vmatprep.subr.mxu0 0.0
        %2664 = vmatpush2.msra.mxu0 0.0
        %2665 = vmatprep.subr.mxu0 0.0
        %2666 = vmatpush2.msra.mxu0 0.0
        %2667 = vmatprep.mubr.f32.mxu0 0.0
        %2668 = vmatmul.mubr.f32.gmra.mxu0 %v2601
        %v2669 = vpop.f32.mrf.mxu0
        %v2670 = vadd.f32 %v2599, %v2669
        %v2671 = vpop.f32.mrf.mxu0
        %v2672 = vadd.f32 %v2599, %v2671
        %2673 = vdwg.mxu0
        %2674 = vmatprep.subr.mxu0 0.0
        %2675 = vmatpush1.msra.mxu0 0.0
        %2676 = vmatprep.subr.mxu0 0.0
        %2677 = vmatpush1.msra.mxu0 0.0
        %2678 = vmatprep.subr.mxu0 0.0
        %2679 = vmatpush1.msra.mxu0 0.0
        %2680 = vmatprep.subr.mxu0 0.0
        %2681 = vmatpush1.msra.mxu0 0.0
        %2682 = vmatprep.subr.mxu0 0.0
        %2683 = vmatpush1.msra.mxu0 0.0
        %2684 = vmatprep.subr.mxu0 0.0
        %2685 = vmatpush1.msra.mxu0 0.0
        %2686 = vmatprep.subr.mxu0 0.0
        %2687 = vmatpush1.msra.mxu0 0.0
        %2688 = vmatprep.subr.mxu0 0.0
        %2689 = vmatpush1.msra.mxu0 0.0
        %2690 = vmatprep.subr.mxu0 0.0
        %2691 = vmatpush1.msra.mxu0 0.0
        %2692 = vmatprep.subr.mxu0 0.0
        %2693 = vmatpush1.msra.mxu0 0.0
        %2694 = vmatprep.subr.mxu0 0.0
        %2695 = vmatpush1.msra.mxu0 0.0
        %2696 = vmatprep.subr.mxu0 0.0
        %2697 = vmatpush1.msra.mxu0 0.0
        %2698 = vmatprep.subr.mxu0 %v2588
        %2699 = vmatpush1.msra.mxu0 %v2587
        %2700 = vmatprep.subr.mxu0 %v2584
        %2701 = vmatpush1.msra.mxu0 %v2583
        %2702 = vmatprep.subr.mxu0 %v2580
        %2703 = vmatpush1.msra.mxu0 %v2579
        %2704 = vmatprep.subr.mxu0 %v2576
        %2705 = vmatpush1.msra.mxu0 %v2575
        %2706 = vmatprep.subr.mxu0 0.0
        %2707 = vmatpush2.msra.mxu0 0.0
        %2708 = vmatprep.subr.mxu0 0.0
        %2709 = vmatpush2.msra.mxu0 0.0
        %2710 = vmatprep.subr.mxu0 0.0
        %2711 = vmatpush2.msra.mxu0 0.0
        %2712 = vmatprep.subr.mxu0 0.0
        %2713 = vmatpush2.msra.mxu0 0.0
        %2714 = vmatprep.subr.mxu0 0.0
        %2715 = vmatpush2.msra.mxu0 0.0
        %2716 = vmatprep.subr.mxu0 0.0
        %2717 = vmatpush2.msra.mxu0 0.0
        %2718 = vmatprep.subr.mxu0 0.0
        %2719 = vmatpush2.msra.mxu0 0.0
        %2720 = vmatprep.subr.mxu0 0.0
        %2721 = vmatpush2.msra.mxu0 0.0
        %2722 = vmatprep.subr.mxu0 0.0
        %2723 = vmatpush2.msra.mxu0 0.0
        %2724 = vmatprep.subr.mxu0 0.0
        %2725 = vmatpush2.msra.mxu0 0.0
        %2726 = vmatprep.subr.mxu0 0.0
        %2727 = vmatpush2.msra.mxu0 0.0
        %2728 = vmatprep.subr.mxu0 0.0
        %2729 = vmatpush2.msra.mxu0 0.0
        %2730 = vmatprep.subr.mxu0 0.0
        %2731 = vmatpush2.msra.mxu0 0.0
        %2732 = vmatprep.subr.mxu0 0.0
        %2733 = vmatpush2.msra.mxu0 0.0
        %2734 = vmatprep.subr.mxu0 0.0
        %2735 = vmatpush2.msra.mxu0 0.0
        %2736 = vmatprep.subr.mxu0 0.0
        %2737 = vmatpush2.msra.mxu0 0.0
        %2738 = vmatprep.mubr.f32.mxu0 0.0
        %2739 = vmatmul.mubr.f32.gmra.mxu0 %v2601
        %v2740 = vpop.f32.mrf.mxu0
        %v2741 = vadd.f32 %v2599, %v2740
        %v2742 = vpop.f32.mrf.mxu0
        %v2743 = vadd.f32 %v2599, %v2742
        %2744 = vdwg.mxu0
        %v2749 = vcombine.low %v2670, %v2672
        %v2750 = vcombine.low %v2741, %v2743
        %v2752 = vunpack.c.l.s4 1966171168
        %v2753 = vunpack.c.0.s8 %v2752
        %v2754 = vlaneseq
        %v2755 = vshrl.u32 %v2754, 7
        %v2756 = vsub.s32 %v2753, %v2755
        %v2757 = vrot.slane %v2749, %v2756
        %v2759 = vunpack.c.l.s4 1966171168
        %v2760 = vunpack.c.0.s8 %v2759
        %v2761 = vlaneseq
        %v2762 = vshrl.u32 %v2761, 7
        %v2763 = vsub.s32 %v2760, %v2762
        %v2764 = vrot.slane %v2750, %v2763
        %v2765 = vcombine.low %v2757, %v2764
        %v2767 = vunpack.c.l.s4 1966171168
        %v2768 = vunpack.c.0.s8 %v2767
        %v2769 = vlaneseq
        %v2770 = vshrl.u32 %v2769, 7
        %v2771 = vsub.s32 %v2768, %v2770
        %v2772 = vrot.slane %v2765, %v2771
        %v2774 = vlaneseq
        %vm2775 = vcmp.ge.s32.totalorder %v2774, 0
        %vm2776 = vcmp.lt.s32.totalorder %v2774, 512
        %vm2777 = vmand %vm2775, %vm2776
        %2778 = vst.msk [vmem:[%s431] sm:$0xf] %vm2777, %v2772
        %s2779 = sand.u32 %s296, 1
        %s2780 = scalar_lea.sflag [#allocation5], %s2779
        %s2781 = sand.u32 %s296, 1
        %s2782 = smul.addr %s2781, 4
        %s2783 = scalar_lea.vmem [#allocation6], %s2782
        // Predicated region
        $region73: #{tpu_custom_call.1} parent=67 // pred_check
          %p2784 = pneg %p306
        $region74: #{tpu_custom_call.1} parent=67 // pred_check_branch
          %2786 = sbr.rel (%p2784) target = $region76
        $region75: #{tpu_custom_call.1} parent=67 // pred_region
          %s2787 = smul.u32 4, %s31
          %s2789 = ssub.s32 64, 64
          %2790 = vsyncadd %s2780, %s2789
          %s2791 = smul.addr %s2787, 16
          %s2792 = scalar_lea.hbm %s12, %s2791
          %s2794 = sshll.u32 %s2783, 4
          %s2795 = int_to_ptr.vmem [resolvable:$true] %s2794
          %2797 = dma.vmem_to_hbm [thread:$0]  %s2795, 64, %s2792, %s2780
        $region76: #{tpu_custom_call.1} parent=67 // pred_fallthru
          _
      $region68: #{tpu_custom_call.1} parent=5 // pred_fallthru
        _
      %p2798 = scmp.le.s32.totalorder 2, %s26
      // Predicated region
      $region77: #{tpu_custom_call.1} parent=5 // pred_check
        %p2799 = pneg %p2798
      $region78: #{tpu_custom_call.1} parent=5 // pred_check_branch
        %2801 = sbr.rel (%p2799) target = $region80
      $region79: #{tpu_custom_call.1} parent=5 // pred_region
        %s2802 = ssub.s32 %s26, 2
        // Predicated region
        $region81: #{tpu_custom_call.1} parent=79 // pred_check
          %p2803 = pneg %p312
        $region82: #{tpu_custom_call.1} parent=79 // pred_check_branch
          %2805 = sbr.rel (%p2803) target = $region84
        $region83: #{tpu_custom_call.1} parent=79 // pred_region
          %s2806 = sand.u32 %s297, 1
          %s2807 = scalar_lea.sflag [#allocation5], %s2806
          %s2808 = sand.u32 %s297, 1
          %s2809 = smul.addr %s2808, 4
          %s2810 = scalar_lea.vmem [#allocation6], %s2809
          %2811 = dma.done %s2807, 64
        $region84: #{tpu_custom_call.1} parent=79 // pred_fallthru
          _
      $region80: #{tpu_custom_call.1} parent=5 // pred_fallthru
        _
    $region6: #{tpu_custom_call.1} parent=1 // loop_footer
      %s30 = sadd.s32 1, %s26
    $region7: #{tpu_custom_call.1} parent=1 // loop_footer_branch
      %25 = sbr.rel target = $region3
    $region8: #{tpu_custom_call.1} parent=1 // loop_exit
      _
    %2812 = vsyncpa [#allocation4], 1
    %s2813 = scalar_lea.sflag [#allocation4], 1
    %2814 = vsyncpa %s2813, 1
    %2815 = vsyncpa [#allocation5], 1
    %s2816 = scalar_lea.sflag [#allocation5], 1
    %2817 = vsyncpa %s2816, 1

</llo_original>
